<compile_context>
chip_gen: v7x
topology: tpu7x:2x2x1
jax: 0.10.0
libtpu: 0.0.40
codegen_flags: <defaults>
</compile_context>

<pallas_src>
import functools

import jax
import jax.numpy as jnp
from jax.experimental import pallas as pl
from jax.experimental.pallas import tpu as pltpu


# ---------------------------------------------------------------------------
# helpers
# ---------------------------------------------------------------------------
def _round_up(v, m):
    return ((v + m - 1) // m) * m


def _pad2d(a, rows, cols):
    r, c = a.shape
    return jnp.pad(a, ((0, rows - r), (0, cols - c)))


def _pick_row_tile(n_pad, e_pad):
    """Largest 128-multiple node-row tile whose bf16 H slab stays comfortably in VMEM."""
    budget = 4 * 1024 * 1024  # bytes for a single bf16 H row tile (Pallas double-buffers it)
    for t in (512, 256, 128):
        if n_pad % t == 0 and t * e_pad * 2 <= budget:
            return t
    return 128


def _default_vmem_limit_bytes():
    """Raise the scoped VMEM limit towards physical VMEM (128 MiB v5e/v6e, 64 MiB v7x)."""
    try:
        cap = int(pltpu.get_tpu_info().vmem_capacity_bytes)
    except Exception:
        return None
    return min((cap * 3) // 4, 100 * 1024 * 1024)


# ---------------------------------------------------------------------------
# fused per-layer kernel: lin_n2e -> edge mean-pool -> bias/PReLU
#                         -> lin_e2n -> node mean-pool -> bias/PReLU
# grid = (phase, node-row tile); phase 0: build e, phase 1: build x
# ---------------------------------------------------------------------------
def _mean_pooling_layer_kernel(
    h_ref,        # (tile_n, E_pad)       bf16  incidence row tile (both phases)
    x_ref,        # (tile_n, Din_pad)     bf16  node-feature row tile (phase 0)
    w_n2e_ref,    # (Din_pad, Ed_pad)     bf16  resident
    b_n2e_ref,    # (1, Ed_pad)           f32   resident
    w_e2n_ref,    # (Ed_pad, Nd_pad)      bf16  resident
    b_e2n_ref,    # (1, Nd_pad)           f32   resident
    de_inv_ref,   # (E_pad, 1)            f32   resident
    dn_inv_ref,   # (tile_n, 1)           f32   row tile (phase 1)
    e_ref,        # out (E_pad, Ed_pad)   f32   VMEM-resident accumulator -> hyperedge features
    x_out_ref,    # out (tile_n, Nd_pad)  f32   node features row tile (phase 1)
    ew_ref,       # scratch (E_pad, Nd_pad) bf16  e @ W_e2n, reused by every phase-1 tile
    *,
    alpha,        # PReLU negative slope, baked as a constant
):
    p = pl.program_id(0)            # 0 = node->edge pooling, 1 = edge->node pooling
    i = pl.program_id(1)            # node-row tile index
    last = pl.num_programs(1) - 1

    @pl.when(p == 0)
    def _node_to_edge():
        @pl.when(i == 0)
        def _init():
            e_ref[...] = jnp.zeros_like(e_ref)

        # lin_n2e on this row tile, then scatter (dense) into hyperedges: e += H_tile^T @ xw
        xw = jnp.dot(x_ref[...], w_n2e_ref[...],
                     preferred_element_type=jnp.float32).astype(jnp.bfloat16)
        e_ref[...] += jnp.dot(h_ref[...].T, xw, preferred_element_type=jnp.float32)

        @pl.when(i == last)
        def _finalize():
            # mean pooling (De^-1), bias, PReLU  -> e (this layer's hyperedge output)
            e = e_ref[...] * de_inv_ref[...] + b_n2e_ref[...]
            e = jnp.where(e >= 0.0, e, alpha * e)
            e_ref[...] = e
            # lin_e2n once, kept resident in VMEM for every phase-1 tile
            ew_ref[...] = jnp.dot(e.astype(jnp.bfloat16), w_e2n_ref[...],
                                  preferred_element_type=jnp.float32).astype(jnp.bfloat16)

    @pl.when(p == 1)
    def _edge_to_node():
        n = jnp.dot(h_ref[...], ew_ref[...], preferred_element_type=jnp.float32)
        n = n * dn_inv_ref[...] + b_e2n_ref[...]
        x_out_ref[...] = jnp.where(n >= 0.0, n, alpha * n)   # act() applied in HyperEncoder loop


def _fused_mean_pooling_layer(h_bf16, x_bf16, w_n2e, b_n2e, w_e2n, b_e2n,
                              de_inv, dn_inv, *, tile_n, alpha, vmem_limit):
    n_pad, e_pad = h_bf16.shape
    din_pad = x_bf16.shape[1]
    ed_pad = w_n2e.shape[1]
    nd_pad = w_e2n.shape[1]
    n_tiles = n_pad // tile_n

    flops = 2 * (n_pad * din_pad * ed_pad      # x @ W_n2e
                 + n_pad * e_pad * ed_pad      # H^T @ xw
                 + e_pad * ed_pad * nd_pad     # e @ W_e2n
                 + n_pad * e_pad * nd_pad)     # H @ ew
    bytes_accessed = int(
        2 * h_bf16.size * 2                               # H streamed in both phases (bf16)
        + x_bf16.size * 2
        + (w_n2e.size + w_e2n.size) * 2
        + (b_n2e.size + b_e2n.size + de_inv.size + dn_inv.size) * 4
        + (e_pad * ed_pad + n_pad * nd_pad) * 4)          # outputs

    kernel = functools.partial(_mean_pooling_layer_kernel, alpha=alpha)

    e_out, x_out = pl.pallas_call(
        kernel,
        out_shape=(
            jax.ShapeDtypeStruct((e_pad, ed_pad), jnp.float32),   # hyperedge features e
            jax.ShapeDtypeStruct((n_pad, nd_pad), jnp.float32),   # node features x
        ),
        grid_spec=pltpu.PrefetchScalarGridSpec(
            num_scalar_prefetch=0,
            grid=(2, n_tiles),                                    # (phase, node-row tile)
            in_specs=[
                pl.BlockSpec((tile_n, e_pad), lambda p, i: (i, 0)),              # H row tile
                pl.BlockSpec((tile_n, din_pad), lambda p, i: (i * (1 - p), 0)),  # x (phase 0)
                pl.BlockSpec((din_pad, ed_pad), lambda p, i: (0, 0)),            # W_n2e
                pl.BlockSpec((1, ed_pad), lambda p, i: (0, 0)),                  # b_n2e
                pl.BlockSpec((ed_pad, nd_pad), lambda p, i: (0, 0)),             # W_e2n
                pl.BlockSpec((1, nd_pad), lambda p, i: (0, 0)),                  # b_e2n
                pl.BlockSpec((e_pad, 1), lambda p, i: (0, 0)),                   # De^-1
                pl.BlockSpec((tile_n, 1), lambda p, i: (i * p, 0)),              # Dn^-1 (phase 1)
            ],
            out_specs=(
                pl.BlockSpec((e_pad, ed_pad), lambda p, i: (0, 0)),      # e: VMEM-resident accumulator
                pl.BlockSpec((tile_n, nd_pad), lambda p, i: (i * p, 0)), # x: written in phase 1
            ),
            scratch_shapes=[pltpu.VMEM((e_pad, nd_pad), jnp.bfloat16)],  # ew = e @ W_e2n
        ),
        compiler_params=pltpu.CompilerParams(
            # both grid axes carry a dependency through the resident e / ew -> sequential
            dimension_semantics=("arbitrary", "arbitrary"),
            vmem_limit_bytes=vmem_limit,
        ),
        cost_estimate=pl.CostEstimate(flops=int(flops), transcendentals=0,
                                      bytes_accessed=bytes_accessed),
    )(h_bf16, x_bf16, w_n2e, b_n2e, w_e2n, b_e2n, de_inv, dn_inv)
    return x_out, e_out


# ---------------------------------------------------------------------------
# parameters + forward (HyperEncoder equivalent)
# ---------------------------------------------------------------------------
def glorot(key, fan_in, fan_out):
    a = (6.0 / (fan_in + fan_out)) ** 0.5
    return jax.random.uniform(key, (fan_in, fan_out), jnp.float32, -a, a)


def make_hyper_encoder_params(key, in_dim, edge_dim, node_dim, num_layers=2):
    """Per-layer (W_n2e, b_n2e, W_e2n, b_e2n); biases zero-init as in the module."""
    params = []
    dims_in = [in_dim] + [node_dim] * (num_layers - 1)
    for layer in range(num_layers):
        key, k1, k2 = jax.random.split(key, 3)
        params.append((
            glorot(k1, dims_in[layer], edge_dim),
            jnp.zeros((1, edge_dim), jnp.float32),
            glorot(k2, edge_dim, node_dim),
            jnp.zeros((1, node_dim), jnp.float32),
        ))
    return params


def hyper_encoder_forward(x, hyperedge_index, num_nodes, num_edges, params, alpha=0.25):
    """Equivalent of HyperEncoder.forward (eval mode, dropout=0, shared PReLU(alpha))."""
    node_idx = hyperedge_index[0]
    edge_idx = hyperedge_index[1]
    edge_dim = params[0][0].shape[1]
    node_dim = params[0][2].shape[1]

    n_pad = _round_up(num_nodes, 128)
    e_pad = _round_up(num_edges, 128)
    tile_n = _pick_row_tile(n_pad, e_pad)
    vmem_limit = _default_vmem_limit_bytes()

    # Dense (multiplicity-counting, matching PyG scatter_add) incidence matrix, padded.
    # TODO(synk): for very large sparse hypergraphs replace the dense-H matmul with a
    # scalar-prefetch (PrefetchScalarGridSpec) gather / segment-sum formulation over nnz.
    H = jnp.zeros((n_pad, e_pad), jnp.float32).at[node_idx, edge_idx].add(1.0)
    Dn = H.sum(axis=1)
    De = H.sum(axis=0)
    dn_inv = jnp.where(Dn > 0, 1.0 / Dn, 0.0).reshape(n_pad, 1)
    de_inv = jnp.where(De > 0, 1.0 / De, 0.0).reshape(e_pad, 1)
    h_bf16 = H.astype(jnp.bfloat16)           # small integer entries -> exact in bf16

    x_cur = _pad2d(x, n_pad, _round_up(x.shape[1], 128))

    x_out = e_out = None
    for (w_n2e, b_n2e, w_e2n, b_e2n) in params:
        din_pad = _round_up(w_n2e.shape[0], 128)
        ed_pad = _round_up(edge_dim, 128)
        nd_pad = _round_up(node_dim, 128)
        x_out, e_out = _fused_mean_pooling_layer(
            h_bf16,
            x_cur.astype(jnp.bfloat16),
            _pad2d(w_n2e, din_pad, ed_pad).astype(jnp.bfloat16),
            _pad2d(b_n2e, 1, ed_pad),
            _pad2d(w_e2n, ed_pad, nd_pad).astype(jnp.bfloat16),
            _pad2d(b_e2n, 1, nd_pad),
            de_inv, dn_inv,
            tile_n=tile_n, alpha=alpha, vmem_limit=vmem_limit,
        )
        x_cur = x_out
    return x_out[:num_nodes, :node_dim], e_out[:num_edges, :edge_dim]


def _reference_forward(x, H, params, alpha):
    """Pure-JAX f32 reference of HyperEncoder.forward (dense incidence)."""
    Dn = H.sum(axis=1)
    De = H.sum(axis=0)
    dn_inv = jnp.where(Dn > 0, 1.0 / Dn, 0.0)[:, None]
    de_inv = jnp.where(De > 0, 1.0 / De, 0.0)[:, None]
    prelu = lambda v: jnp.where(v >= 0.0, v, alpha * v)
    e = None
    for (w_n2e, b_n2e, w_e2n, b_e2n) in params:
        e = prelu(de_inv * (H.T @ (x @ w_n2e)) + b_n2e)   # act inside MeanPoolingConv
        x = prelu(dn_inv * (H @ (e @ w_e2n)) + b_e2n)     # act in HyperEncoder loop
    return x, e


if __name__ == "__main__":
    # Small hypergraph, shapes consistent with the module (exercises 3 node-row tiles).
    num_nodes, num_edges = 300, 40
    in_dim, edge_dim, node_dim, num_layers = 24, 32, 16, 2

    key = jax.random.PRNGKey(0)
    kx, kh, kp = jax.random.split(key, 3)

    x = jax.random.normal(kx, (num_nodes, in_dim), jnp.float32)

    # COO hyperedge_index [2, nnz]: each node in one deterministic edge + one random edge.
    base_nodes = jnp.arange(num_nodes, dtype=jnp.int32)
    base_edges = base_nodes % num_edges
    extra_edges = jax.random.randint(kh, (num_nodes,), 0, num_edges, dtype=jnp.int32)
    node_idx = jnp.concatenate([base_nodes, base_nodes])
    edge_idx = jnp.concatenate([base_edges, extra_edges])
    hyperedge_index = jnp.stack([node_idx, edge_idx])

    params = make_hyper_encoder_params(kp, in_dim, edge_dim, node_dim, num_layers)
    alpha = 0.25   # shared nn.PReLU() default negative slope

    x_out, e_out = hyper_encoder_forward(
        x, hyperedge_index, num_nodes, num_edges, params, alpha)
    jax.block_until_ready((x_out, e_out))

    assert x_out.shape == (num_nodes, node_dim)
    assert e_out.shape == (num_edges, edge_dim)

    # Pure-JAX f32 reference (kernel uses bf16 MXU inputs -> loose tolerance).
    H_ref = jnp.zeros((num_nodes, num_edges), jnp.float32).at[node_idx, edge_idx].add(1.0)
    x_ref, e_ref = _reference_forward(x, H_ref, params, alpha)
    assert jnp.allclose(x_out, x_ref, rtol=3e-2, atol=3e-2), \
        float(jnp.max(jnp.abs(x_out - x_ref)))
    assert jnp.allclose(e_out, e_ref, rtol=3e-2, atol=3e-2), \
        float(jnp.max(jnp.abs(e_out - e_ref)))

    print("KERNEL_OK")
</pallas_src>

<mosaic_0001>
module attributes {stable_mosaic.version = 11 : i64} {
  func.func @_mean_pooling_layer_kernel(%arg0: i32, %arg1: i32, %arg2: memref<128x128xbf16, #tpu.memory_space<vmem>>, %arg3: memref<128x128xbf16, #tpu.memory_space<vmem>>, %arg4: memref<128x128xbf16, #tpu.memory_space<vmem>>, %arg5: memref<1x128xf32, #tpu.memory_space<vmem>>, %arg6: memref<128x128xbf16, #tpu.memory_space<vmem>>, %arg7: memref<1x128xf32, #tpu.memory_space<vmem>>, %arg8: memref<128x1xf32, #tpu.memory_space<vmem>>, %arg9: memref<128x1xf32, #tpu.memory_space<vmem>>, %arg10: memref<128x128xf32, #tpu.memory_space<vmem>>, %arg11: memref<128x128xf32, #tpu.memory_space<vmem>>, %arg12: memref<128x128xbf16, #tpu.memory_space<vmem>>) attributes {dimension_semantics = [#tpu.dimension_semantics<arbitrary>, #tpu.dimension_semantics<arbitrary>], iteration_bounds = array<i64: 2, 3>, scalar_prefetch = 0 : i64, scratch_operands = 1 : i64, tpu.core_type = #tpu.core_type<tc>, window_params = [{transform_indices = @transform_0, window_bounds = array<i64: 128, 128>}, {transform_indices = @transform_1, window_bounds = array<i64: 128, 128>}, {pipeline_mode = #tpu.pipeline_mode<synchronous>, transform_indices = @transform_2, window_bounds = array<i64: 128, 128>}, {pipeline_mode = #tpu.pipeline_mode<synchronous>, transform_indices = @transform_3, window_bounds = array<i64: 1, 128>}, {pipeline_mode = #tpu.pipeline_mode<synchronous>, transform_indices = @transform_4, window_bounds = array<i64: 128, 128>}, {pipeline_mode = #tpu.pipeline_mode<synchronous>, transform_indices = @transform_5, window_bounds = array<i64: 1, 128>}, {pipeline_mode = #tpu.pipeline_mode<synchronous>, transform_indices = @transform_6, window_bounds = array<i64: 128, 1>}, {transform_indices = @transform_7, window_bounds = array<i64: 128, 1>}, {pipeline_mode = #tpu.pipeline_mode<synchronous>, transform_indices = @transform_8, window_bounds = array<i64: 128, 128>}, {transform_indices = @transform_9, window_bounds = array<i64: 128, 128>}]} {
    %c0_i32 = arith.constant 0 : i32
    %0 = arith.cmpi eq, %arg0, %c0_i32 : i32
    %1 = arith.extui %0 : i1 to i32
    %c0_i32_0 = arith.constant 0 : i32
    %2 = arith.cmpi ne, %1, %c0_i32_0 : i32
    scf.if %2 {
      %c0_i32_2 = arith.constant 0 : i32
      %6 = arith.cmpi eq, %arg1, %c0_i32_2 : i32
      %7 = arith.extui %6 : i1 to i32
      %c0_i32_3 = arith.constant 0 : i32
      %8 = arith.cmpi ne, %7, %c0_i32_3 : i32
      scf.if %8 {
        %cst_15 = arith.constant 0.000000e+00 : f32
        %22 = vector.broadcast %cst_15 : f32 to vector<128x128xf32>
        %c0_16 = arith.constant 0 : index
        %c0_17 = arith.constant 0 : index
        %23 = vector.load %arg10[%c0_16, %c0_17] : memref<128x128xf32, #tpu.memory_space<vmem>>, vector<128x128xf32>
        tpu.vector_store %arg10[%c0_16, %c0_17], %22 {strides = array<i32>} : memref<128x128xf32, #tpu.memory_space<vmem>>, vector<128x128xf32>,
      } else {
      }
      %c0 = arith.constant 0 : index
      %c0_4 = arith.constant 0 : index
      %9 = vector.load %arg3[%c0, %c0_4] : memref<128x128xbf16, #tpu.memory_space<vmem>>, vector<128x128xbf16>
      %c0_5 = arith.constant 0 : index
      %c0_6 = arith.constant 0 : index
      %10 = vector.load %arg4[%c0_5, %c0_6] : memref<128x128xbf16, #tpu.memory_space<vmem>>, vector<128x128xbf16>
      %cst = arith.constant dense<0.000000e+00> : vector<128x128xf32>
      %11 = tpu.matmul %9, %10, %cst {dimension_numbers = #tpu.dot_dimension_numbers<[1], [0], [0], [1], [0, 0, 1, 1], [], []>} : vector<128x128xbf16>, vector<128x128xbf16>, vector<128x128xf32> -> vector<128x128xf32>
      %12 = arith.truncf %11 : vector<128x128xf32> to vector<128x128xbf16>
      %c0_7 = arith.constant 0 : index
      %c0_8 = arith.constant 0 : index
      %13 = vector.load %arg10[%c0_7, %c0_8] : memref<128x128xf32, #tpu.memory_space<vmem>>, vector<128x128xf32>
      %c0_9 = arith.constant 0 : index
      %c0_10 = arith.constant 0 : index
      %14 = vector.load %arg2[%c0_9, %c0_10] : memref<128x128xbf16, #tpu.memory_space<vmem>>, vector<128x128xbf16>
      %15 = tpu.transpose %14, [1, 0] : vector<128x128xbf16> -> vector<128x128xbf16>
      %cst_11 = arith.constant dense<0.000000e+00> : vector<128x128xf32>
      %16 = tpu.matmul %15, %12, %cst_11 {dimension_numbers = #tpu.dot_dimension_numbers<[1], [0], [0], [1], [0, 0, 1, 1], [], []>} : vector<128x128xbf16>, vector<128x128xbf16>, vector<128x128xf32> -> vector<128x128xf32>
      %17 = arith.addf %13, %16 : vector<128x128xf32>
      %c0_12 = arith.constant 0 : index
      %c0_13 = arith.constant 0 : index
      %18 = vector.load %arg10[%c0_12, %c0_13] : memref<128x128xf32, #tpu.memory_space<vmem>>, vector<128x128xf32>
      tpu.vector_store %arg10[%c0_12, %c0_13], %17 {strides = array<i32>} : memref<128x128xf32, #tpu.memory_space<vmem>>, vector<128x128xf32>,
      %c2_i32 = arith.constant 2 : i32
      %19 = arith.cmpi eq, %arg1, %c2_i32 : i32
      %20 = arith.extui %19 : i1 to i32
      %c0_i32_14 = arith.constant 0 : i32
      %21 = arith.cmpi ne, %20, %c0_i32_14 : i32
      scf.if %21 {
        %c0_15 = arith.constant 0 : index
        %c0_16 = arith.constant 0 : index
        %22 = vector.load %arg10[%c0_15, %c0_16] : memref<128x128xf32, #tpu.memory_space<vmem>>, vector<128x128xf32>
        %c0_17 = arith.constant 0 : index
        %c0_18 = arith.constant 0 : index
        %23 = vector.load %arg8[%c0_17, %c0_18] : memref<128x1xf32, #tpu.memory_space<vmem>>, vector<128x1xf32>
        %24 = vector.broadcast %23 : vector<128x1xf32> to vector<128x128xf32>
        %25 = arith.mulf %22, %24 : vector<128x128xf32>
        %c0_19 = arith.constant 0 : index
        %c0_20 = arith.constant 0 : index
        %26 = vector.load %arg5[%c0_19, %c0_20] : memref<1x128xf32, #tpu.memory_space<vmem>>, vector<1x128xf32>
        %27 = vector.broadcast %26 : vector<1x128xf32> to vector<128x128xf32>
        %28 = arith.addf %25, %27 : vector<128x128xf32>
        %cst_21 = arith.constant 0.000000e+00 : f32
        %29 = vector.broadcast %cst_21 : f32 to vector<128x128xf32>
        %30 = arith.cmpf oge, %28, %29 : vector<128x128xf32>
        %cst_22 = arith.constant 2.500000e-01 : f32
        %31 = vector.broadcast %cst_22 : f32 to vector<128x128xf32>
        %32 = arith.mulf %31, %28 : vector<128x128xf32>
        %33 = arith.select %30, %28, %32 : vector<128x128xi1>, vector<128x128xf32>
        %c0_23 = arith.constant 0 : index
        %c0_24 = arith.constant 0 : index
        %34 = vector.load %arg10[%c0_23, %c0_24] : memref<128x128xf32, #tpu.memory_space<vmem>>, vector<128x128xf32>
        tpu.vector_store %arg10[%c0_23, %c0_24], %33 {strides = array<i32>} : memref<128x128xf32, #tpu.memory_space<vmem>>, vector<128x128xf32>,
        %35 = arith.truncf %33 : vector<128x128xf32> to vector<128x128xbf16>
        %c0_25 = arith.constant 0 : index
        %c0_26 = arith.constant 0 : index
        %36 = vector.load %arg6[%c0_25, %c0_26] : memref<128x128xbf16, #tpu.memory_space<vmem>>, vector<128x128xbf16>
        %cst_27 = arith.constant dense<0.000000e+00> : vector<128x128xf32>
        %37 = tpu.matmul %35, %36, %cst_27 {dimension_numbers = #tpu.dot_dimension_numbers<[1], [0], [0], [1], [0, 0, 1, 1], [], []>} : vector<128x128xbf16>, vector<128x128xbf16>, vector<128x128xf32> -> vector<128x128xf32>
        %38 = arith.truncf %37 : vector<128x128xf32> to vector<128x128xbf16>
        %c0_28 = arith.constant 0 : index
        %c0_29 = arith.constant 0 : index
        %39 = vector.load %arg12[%c0_28, %c0_29] : memref<128x128xbf16, #tpu.memory_space<vmem>>, vector<128x128xbf16>
        tpu.vector_store %arg12[%c0_28, %c0_29], %38 {strides = array<i32>} : memref<128x128xbf16, #tpu.memory_space<vmem>>, vector<128x128xbf16>,
      } else {
      }
    } else {
    }
    %c1_i32 = arith.constant 1 : i32
    %3 = arith.cmpi eq, %arg0, %c1_i32 : i32
    %4 = arith.extui %3 : i1 to i32
    %c0_i32_1 = arith.constant 0 : i32
    %5 = arith.cmpi ne, %4, %c0_i32_1 : i32
    scf.if %5 {
      %c0 = arith.constant 0 : index
      %c0_2 = arith.constant 0 : index
      %6 = vector.load %arg2[%c0, %c0_2] : memref<128x128xbf16, #tpu.memory_space<vmem>>, vector<128x128xbf16>
      %c0_3 = arith.constant 0 : index
      %c0_4 = arith.constant 0 : index
      %7 = vector.load %arg12[%c0_3, %c0_4] : memref<128x128xbf16, #tpu.memory_space<vmem>>, vector<128x128xbf16>
      %cst = arith.constant dense<0.000000e+00> : vector<128x128xf32>
      %8 = tpu.matmul %6, %7, %cst {dimension_numbers = #tpu.dot_dimension_numbers<[1], [0], [0], [1], [0, 0, 1, 1], [], []>} : vector<128x128xbf16>, vector<128x128xbf16>, vector<128x128xf32> -> vector<128x128xf32>
      %c0_5 = arith.constant 0 : index
      %c0_6 = arith.constant 0 : index
      %9 = vector.load %arg9[%c0_5, %c0_6] : memref<128x1xf32, #tpu.memory_space<vmem>>, vector<128x1xf32>
      %10 = vector.broadcast %9 : vector<128x1xf32> to vector<128x128xf32>
      %11 = arith.mulf %8, %10 : vector<128x128xf32>
      %c0_7 = arith.constant 0 : index
      %c0_8 = arith.constant 0 : index
      %12 = vector.load %arg7[%c0_7, %c0_8] : memref<1x128xf32, #tpu.memory_space<vmem>>, vector<1x128xf32>
      %13 = vector.broadcast %12 : vector<1x128xf32> to vector<128x128xf32>
      %14 = arith.addf %11, %13 : vector<128x128xf32>
      %cst_9 = arith.constant 0.000000e+00 : f32
      %15 = vector.broadcast %cst_9 : f32 to vector<128x128xf32>
      %16 = arith.cmpf oge, %14, %15 : vector<128x128xf32>
      %cst_10 = arith.constant 2.500000e-01 : f32
      %17 = vector.broadcast %cst_10 : f32 to vector<128x128xf32>
      %18 = arith.mulf %17, %14 : vector<128x128xf32>
      %19 = arith.select %16, %14, %18 : vector<128x128xi1>, vector<128x128xf32>
      %c0_11 = arith.constant 0 : index
      %c0_12 = arith.constant 0 : index
      %20 = vector.load %arg11[%c0_11, %c0_12] : memref<128x128xf32, #tpu.memory_space<vmem>>, vector<128x128xf32>
      tpu.vector_store %arg11[%c0_11, %c0_12], %19 {strides = array<i32>} : memref<128x128xf32, #tpu.memory_space<vmem>>, vector<128x128xf32>,
    } else {
    }
    return
  }
  func.func @transform_0(%arg0: i32, %arg1: i32) -> (i32, i32) {
    %c0_i32 = arith.constant 0 : i32
    %c0_i32_0 = arith.constant 0 : i32
    return %arg1, %c0_i32 : i32, i32
  }
  func.func @transform_1(%arg0: i32, %arg1: i32) -> (i32, i32) {
    %c1_i32 = arith.constant 1 : i32
    %0 = arith.subi %c1_i32, %arg0 : i32
    %1 = arith.muli %arg1, %0 : i32
    %c0_i32 = arith.constant 0 : i32
    %c0_i32_0 = arith.constant 0 : i32
    return %1, %c0_i32 : i32, i32
  }
  func.func @transform_2(%arg0: i32, %arg1: i32) -> (i32, i32) {
    %c0_i32 = arith.constant 0 : i32
    %c0_i32_0 = arith.constant 0 : i32
    %c0_i32_1 = arith.constant 0 : i32
    return %c0_i32, %c0_i32_0 : i32, i32
  }
  func.func @transform_3(%arg0: i32, %arg1: i32) -> (i32, i32) {
    %c0_i32 = arith.constant 0 : i32
    %c0_i32_0 = arith.constant 0 : i32
    %c0_i32_1 = arith.constant 0 : i32
    return %c0_i32, %c0_i32_0 : i32, i32
  }
  func.func @transform_4(%arg0: i32, %arg1: i32) -> (i32, i32) {
    %c0_i32 = arith.constant 0 : i32
    %c0_i32_0 = arith.constant 0 : i32
    %c0_i32_1 = arith.constant 0 : i32
    return %c0_i32, %c0_i32_0 : i32, i32
  }
  func.func @transform_5(%arg0: i32, %arg1: i32) -> (i32, i32) {
    %c0_i32 = arith.constant 0 : i32
    %c0_i32_0 = arith.constant 0 : i32
    %c0_i32_1 = arith.constant 0 : i32
    return %c0_i32, %c0_i32_0 : i32, i32
  }
  func.func @transform_6(%arg0: i32, %arg1: i32) -> (i32, i32) {
    %c0_i32 = arith.constant 0 : i32
    %c0_i32_0 = arith.constant 0 : i32
    %c0_i32_1 = arith.constant 0 : i32
    return %c0_i32, %c0_i32_0 : i32, i32
  }
  func.func @transform_7(%arg0: i32, %arg1: i32) -> (i32, i32) {
    %0 = arith.muli %arg1, %arg0 : i32
    %c0_i32 = arith.constant 0 : i32
    %c0_i32_0 = arith.constant 0 : i32
    return %0, %c0_i32 : i32, i32
  }
  func.func @transform_8(%arg0: i32, %arg1: i32) -> (i32, i32) {
    %c0_i32 = arith.constant 0 : i32
    %c0_i32_0 = arith.constant 0 : i32
    %c0_i32_1 = arith.constant 0 : i32
    return %c0_i32, %c0_i32_0 : i32, i32
  }
  func.func @transform_9(%arg0: i32, %arg1: i32) -> (i32, i32) {
    %0 = arith.muli %arg1, %arg0 : i32
    %c0_i32 = arith.constant 0 : i32
    %c0_i32_0 = arith.constant 0 : i32
    return %0, %c0_i32 : i32, i32
  }
}

</mosaic_0001>

<llo_original>
// kernel: tpu_custom_call.1
$region0: #{tpu_custom_call.1}
  #allocation0 [shape = 'u32[]', space=smem, size = 0x4, offset = 0x4, fixed_abs, tag = 'smem constant byte address 0x4 - core index']
  #allocation1 [shape = 'u32[144,128]{1,0:T(1,128)}', space=vmem, size = 0x12000, scoped, tag = 'internal scratch']
  #allocation2 [shape = 'bf16[128,128]{1,0:T(16,128)(2,1)}', space=vmem, size = 0x8000, scoped, tag = 'scratch operand']
  %s0 = inlined_call_operand.vmem [shape: bf16[384,128], index: 0, kind: input, shape index: {}]
  %s1 = inlined_call_operand.vmem [shape: bf16[384,128], index: 1, kind: input, shape index: {}]
  %s2 = inlined_call_operand.vmem [shape: bf16[128,128], index: 2, kind: input, shape index: {}]
  %s3 = inlined_call_operand.vmem [shape: f32[1,128], index: 3, kind: input, shape index: {}]
  %s4 = inlined_call_operand.vmem [shape: bf16[128,128], index: 4, kind: input, shape index: {}]
  %s5 = inlined_call_operand.vmem [shape: f32[1,128], index: 5, kind: input, shape index: {}]
  %s6 = inlined_call_operand.vmem [shape: f32[128,1], index: 6, kind: input, shape index: {}]
  %s7 = inlined_call_operand.vmem [shape: f32[384,1], index: 7, kind: input, shape index: {}]
  %s8 = inlined_call_operand.hbm [shape: f32[128,128], index: 8, kind: output, shape index: {0}]
  %s9 = inlined_call_operand.hbm [shape: f32[384,128], index: 9, kind: output, shape index: {1}]
  %10 = xla_tuple %s8, %s9
  %s11 = sld [smem:[#allocation0]]
  $region89: #{tpu_custom_call.1} parent=0
    _
  %s13 = ssub.s32 1, %s11
  %s14 = scalar_select 0, %s13, %s11
  $region1: #{tpu_custom_call.1} parent=0
    #allocation3 [shape = 'u8[65536]{0}', space=vmem, size = 0x10000, scoped, tag = 'output window, operand 0, single buffered']
    #allocation4 [shape = 's32[2]{0}', space=sflag, size = 0x8, scoped, tag = 'scoped memory for tpu_custom_call.1']
    #allocation5 [shape = 'u8[131072]{0}', space=vmem, size = 0x20000, scoped, tag = 'output window, operand 1']
    #allocation6 [shape = 's32[2]{0}', space=sflag, size = 0x8, scoped, tag = 'scoped memory for tpu_custom_call.1']
    %15 = vsyncpa [#allocation4], 0
    %16 = vsyncpa [#allocation6], 0
    %s17 = scalar_lea.sflag [#allocation6], 1
    %18 = vsyncpa %s17, 0
    loop: start=0, step=1, limit=8
    $region2: #{tpu_custom_call.1} parent=1 // loop_pre_header
      _
    $region3: #{tpu_custom_call.1} parent=1 // loop_header
      %s20 = sphi 0, %s24
      %p21 = scmp.ge.s32.totalorder %s20, 8
      %s27 = sphi 0, %s39
      %s28 = sphi 0, %s35
      %s29 = sphi 0, %s27
      %s30 = sphi 0, %s28
      %s31 = sphi 0, %s29
      %s32 = sphi 0, %s30
      %s42 = sphi 0, %s44
      %s45 = sphi 0, %s42
      %s46 = sphi 0, %s45
      %s62 = sphi 0, %s46
      %s72 = sphi 0, %s74
      %s75 = sphi 0, %s72
      %s76 = sphi 0, %s75
      %s92 = sphi 0, %s76
      %s96 = sphi 0, %s96
      %s98 = sphi 0, %s96
      %s99 = sphi 0, %s98
      %s113 = sphi 0, %s99
      %s117 = sphi 0, %s117
      %s119 = sphi 0, %s117
      %s120 = sphi 0, %s119
      %s134 = sphi 0, %s120
      %s138 = sphi 0, %s138
      %s140 = sphi 0, %s138
      %s141 = sphi 0, %s140
      %s155 = sphi 0, %s141
      %s159 = sphi 0, %s159
      %s161 = sphi 0, %s159
      %s162 = sphi 0, %s161
      %s176 = sphi 0, %s162
      %s180 = sphi 0, %s180
      %s182 = sphi 0, %s180
      %s183 = sphi 0, %s182
      %s197 = sphi 0, %s183
      %s205 = sphi 0, %s207
      %s208 = sphi 0, %s205
      %s209 = sphi 0, %s208
      %s225 = sphi 0, %s209
      %s229 = sphi 0, %s229
      %s231 = sphi 0, %s229
      %s232 = sphi 0, %s231
      %s246 = sphi 0, %s232
      %s254 = sphi 0, %s256
      %s257 = sphi 0, %s254
      %s258 = sphi 0, %s257
      %s274 = sphi 0, %s258
    $region4: #{tpu_custom_call.1} parent=1 // loop_header_branch
      %23 = sbr.rel (%p21) target = $region8
    $region5: #{tpu_custom_call.1} parent=1 // loop_body
      %s25 = ssub.s32 %s20, 1
      %s26 = ssub.s32 %s20, 2
      %s33 = sadd.s32 1, %s28
      %p34 = scmp.ge.s32.totalorder %s33, 3
      %s35 = scalar_select %p34, 0, %s33
      %s36 = sadd.s32 1, %s27
      %s37 = scalar_select %p34, %s36, %s27
      %p38 = scmp.ge.s32.totalorder %s37, 2
      %s39 = scalar_select %p38, 0, %s37
      %s40 = ssub.s32 %s28, %s35
      %p41 = scmp.eq.s32.totalorder %s40, 0
      %s43 = sadd.s32 %s42, 1
      %s44 = scalar_select %p41, %s42, %s43
      %p47 = pneg %p41
      %p48 = scmp.eq.s32.totalorder %s20, 5
      %p49 = por %p47, %p48
      %p50 = scmp.ne.s32.totalorder %s42, %s45
      %p51 = scmp.eq.s32.totalorder %s20, 0
      %p52 = por %p50, %p51
      %p53 = scmp.ne.s32.totalorder %s42, %s45
      %p54 = scmp.eq.s32.totalorder %s25, 5
      %p55 = por %p53, %p54
      %p56 = scmp.ne.s32.totalorder %s45, %s46
      %p57 = scmp.eq.s32.totalorder %s25, 0
      %p58 = por %p56, %p57
      %p59 = scmp.ne.s32.totalorder %s45, %s46
      %p60 = scmp.eq.s32.totalorder %s26, 5
      %p61 = por %p59, %p60
      %p63 = scmp.ne.s32.totalorder %s46, %s62
      %p64 = scmp.eq.s32.totalorder %s26, 0
      %p65 = por %p63, %p64
      %s66 = ssub.s32 1, %s27
      %s67 = smul.u32 %s28, %s66
      %s68 = ssub.s32 1, %s39
      %s69 = smul.u32 %s35, %s68
      %s70 = ssub.s32 %s67, %s69
      %p71 = scmp.eq.s32.totalorder %s70, 0
      %s73 = sadd.s32 %s72, 1
      %s74 = scalar_select %p71, %s72, %s73
      %p77 = pneg %p71
      %p78 = scmp.eq.s32.totalorder %s20, 5
      %p79 = por %p77, %p78
      %p80 = scmp.ne.s32.totalorder %s72, %s75
      %p81 = scmp.eq.s32.totalorder %s20, 0
      %p82 = por %p80, %p81
      %p83 = scmp.ne.s32.totalorder %s72, %s75
      %p84 = scmp.eq.s32.totalorder %s25, 5
      %p85 = por %p83, %p84
      %p86 = scmp.ne.s32.totalorder %s75, %s76
      %p87 = scmp.eq.s32.totalorder %s25, 0
      %p88 = por %p86, %p87
      %p89 = scmp.ne.s32.totalorder %s75, %s76
      %p90 = scmp.eq.s32.totalorder %s26, 5
      %p91 = por %p89, %p90
      %p93 = scmp.ne.s32.totalorder %s76, %s92
      %p94 = scmp.eq.s32.totalorder %s26, 0
      %p95 = por %p93, %p94
      %s97 = sadd.s32 %s96, 1
      %p100 = scmp.eq.s32.totalorder %s20, 5
      %p101 = scmp.ne.s32.totalorder %s96, %s98
      %p102 = scmp.eq.s32.totalorder %s20, 0
      %p103 = por %p101, %p102
      %p104 = scmp.ne.s32.totalorder %s96, %s98
      %p105 = scmp.eq.s32.totalorder %s25, 5
      %p106 = por %p104, %p105
      %p107 = scmp.ne.s32.totalorder %s98, %s99
      %p108 = scmp.eq.s32.totalorder %s25, 0
      %p109 = por %p107, %p108
      %p110 = scmp.ne.s32.totalorder %s98, %s99
      %p111 = scmp.eq.s32.totalorder %s26, 5
      %p112 = por %p110, %p111
      %p114 = scmp.ne.s32.totalorder %s99, %s113
      %p115 = scmp.eq.s32.totalorder %s26, 0
      %p116 = por %p114, %p115
      %s118 = sadd.s32 %s117, 1
      %p121 = scmp.eq.s32.totalorder %s20, 5
      %p122 = scmp.ne.s32.totalorder %s117, %s119
      %p123 = scmp.eq.s32.totalorder %s20, 0
      %p124 = por %p122, %p123
      %p125 = scmp.ne.s32.totalorder %s117, %s119
      %p126 = scmp.eq.s32.totalorder %s25, 5
      %p127 = por %p125, %p126
      %p128 = scmp.ne.s32.totalorder %s119, %s120
      %p129 = scmp.eq.s32.totalorder %s25, 0
      %p130 = por %p128, %p129
      %p131 = scmp.ne.s32.totalorder %s119, %s120
      %p132 = scmp.eq.s32.totalorder %s26, 5
      %p133 = por %p131, %p132
      %p135 = scmp.ne.s32.totalorder %s120, %s134
      %p136 = scmp.eq.s32.totalorder %s26, 0
      %p137 = por %p135, %p136
      %s139 = sadd.s32 %s138, 1
      %p142 = scmp.eq.s32.totalorder %s20, 5
      %p143 = scmp.ne.s32.totalorder %s138, %s140
      %p144 = scmp.eq.s32.totalorder %s20, 0
      %p145 = por %p143, %p144
      %p146 = scmp.ne.s32.totalorder %s138, %s140
      %p147 = scmp.eq.s32.totalorder %s25, 5
      %p148 = por %p146, %p147
      %p149 = scmp.ne.s32.totalorder %s140, %s141
      %p150 = scmp.eq.s32.totalorder %s25, 0
      %p151 = por %p149, %p150
      %p152 = scmp.ne.s32.totalorder %s140, %s141
      %p153 = scmp.eq.s32.totalorder %s26, 5
      %p154 = por %p152, %p153
      %p156 = scmp.ne.s32.totalorder %s141, %s155
      %p157 = scmp.eq.s32.totalorder %s26, 0
      %p158 = por %p156, %p157
      %s160 = sadd.s32 %s159, 1
      %p163 = scmp.eq.s32.totalorder %s20, 5
      %p164 = scmp.ne.s32.totalorder %s159, %s161
      %p165 = scmp.eq.s32.totalorder %s20, 0
      %p166 = por %p164, %p165
      %p167 = scmp.ne.s32.totalorder %s159, %s161
      %p168 = scmp.eq.s32.totalorder %s25, 5
      %p169 = por %p167, %p168
      %p170 = scmp.ne.s32.totalorder %s161, %s162
      %p171 = scmp.eq.s32.totalorder %s25, 0
      %p172 = por %p170, %p171
      %p173 = scmp.ne.s32.totalorder %s161, %s162
      %p174 = scmp.eq.s32.totalorder %s26, 5
      %p175 = por %p173, %p174
      %p177 = scmp.ne.s32.totalorder %s162, %s176
      %p178 = scmp.eq.s32.totalorder %s26, 0
      %p179 = por %p177, %p178
      %s181 = sadd.s32 %s180, 1
      %p184 = scmp.eq.s32.totalorder %s20, 5
      %p185 = scmp.ne.s32.totalorder %s180, %s182
      %p186 = scmp.eq.s32.totalorder %s20, 0
      %p187 = por %p185, %p186
      %p188 = scmp.ne.s32.totalorder %s180, %s182
      %p189 = scmp.eq.s32.totalorder %s25, 5
      %p190 = por %p188, %p189
      %p191 = scmp.ne.s32.totalorder %s182, %s183
      %p192 = scmp.eq.s32.totalorder %s25, 0
      %p193 = por %p191, %p192
      %p194 = scmp.ne.s32.totalorder %s182, %s183
      %p195 = scmp.eq.s32.totalorder %s26, 5
      %p196 = por %p194, %p195
      %p198 = scmp.ne.s32.totalorder %s183, %s197
      %p199 = scmp.eq.s32.totalorder %s26, 0
      %p200 = por %p198, %p199
      %s201 = smul.u32 %s28, %s27
      %s202 = smul.u32 %s35, %s39
      %s203 = ssub.s32 %s201, %s202
      %p204 = scmp.eq.s32.totalorder %s203, 0
      %s206 = sadd.s32 %s205, 1
      %s207 = scalar_select %p204, %s205, %s206
      %p210 = pneg %p204
      %p211 = scmp.eq.s32.totalorder %s20, 5
      %p212 = por %p210, %p211
      %p213 = scmp.ne.s32.totalorder %s205, %s208
      %p214 = scmp.eq.s32.totalorder %s20, 0
      %p215 = por %p213, %p214
      %p216 = scmp.ne.s32.totalorder %s205, %s208
      %p217 = scmp.eq.s32.totalorder %s25, 5
      %p218 = por %p216, %p217
      %p219 = scmp.ne.s32.totalorder %s208, %s209
      %p220 = scmp.eq.s32.totalorder %s25, 0
      %p221 = por %p219, %p220
      %p222 = scmp.ne.s32.totalorder %s208, %s209
      %p223 = scmp.eq.s32.totalorder %s26, 5
      %p224 = por %p222, %p223
      %p226 = scmp.ne.s32.totalorder %s209, %s225
      %p227 = scmp.eq.s32.totalorder %s26, 0
      %p228 = por %p226, %p227
      %s230 = sadd.s32 %s229, 1
      %p233 = scmp.eq.s32.totalorder %s20, 5
      %p234 = scmp.ne.s32.totalorder %s229, %s231
      %p235 = scmp.eq.s32.totalorder %s20, 0
      %p236 = por %p234, %p235
      %p237 = scmp.ne.s32.totalorder %s229, %s231
      %p238 = scmp.eq.s32.totalorder %s25, 5
      %p239 = por %p237, %p238
      %p240 = scmp.ne.s32.totalorder %s231, %s232
      %p241 = scmp.eq.s32.totalorder %s25, 0
      %p242 = por %p240, %p241
      %p243 = scmp.ne.s32.totalorder %s231, %s232
      %p244 = scmp.eq.s32.totalorder %s26, 5
      %p245 = por %p243, %p244
      %p247 = scmp.ne.s32.totalorder %s232, %s246
      %p248 = scmp.eq.s32.totalorder %s26, 0
      %p249 = por %p247, %p248
      %s250 = smul.u32 %s28, %s27
      %s251 = smul.u32 %s35, %s39
      %s252 = ssub.s32 %s250, %s251
      %p253 = scmp.eq.s32.totalorder %s252, 0
      %s255 = sadd.s32 %s254, 1
      %s256 = scalar_select %p253, %s254, %s255
      %p259 = pneg %p253
      %p260 = scmp.eq.s32.totalorder %s20, 5
      %p261 = por %p259, %p260
      %p262 = scmp.ne.s32.totalorder %s254, %s257
      %p263 = scmp.eq.s32.totalorder %s20, 0
      %p264 = por %p262, %p263
      %p265 = scmp.ne.s32.totalorder %s254, %s257
      %p266 = scmp.eq.s32.totalorder %s25, 5
      %p267 = por %p265, %p266
      %p268 = scmp.ne.s32.totalorder %s257, %s258
      %p269 = scmp.eq.s32.totalorder %s25, 0
      %p270 = por %p268, %p269
      %p271 = scmp.ne.s32.totalorder %s257, %s258
      %p272 = scmp.eq.s32.totalorder %s26, 5
      %p273 = por %p271, %p272
      %p275 = scmp.ne.s32.totalorder %s258, %s274
      %p276 = scmp.eq.s32.totalorder %s26, 0
      %p277 = por %p275, %p276
      %p278 = scmp.le.s32.totalorder 1, %s20
      %p279 = scmp.lt.s32.totalorder %s20, 7
      %p280 = pnand %p278, %p279
      %p281 = pneg %p280
      // Predicated region
      $region9: #{tpu_custom_call.1} parent=5 // pred_check
        _
      $region10: #{tpu_custom_call.1} parent=5 // pred_check_branch
        %283 = sbr.rel (%p280) target = $region12
      $region11: #{tpu_custom_call.1} parent=5 // pred_region
        %s284 = ssub.s32 %s20, 1
        // Predicated region
        $region13: #{tpu_custom_call.1} parent=11 // pred_check
          %p285 = pneg %p109
        $region14: #{tpu_custom_call.1} parent=11 // pred_check_branch
          %287 = sbr.rel (%p285) target = $region16
        $region15: #{tpu_custom_call.1} parent=11 // pred_region
          _
        $region16: #{tpu_custom_call.1} parent=11 // pred_fallthru
          _
        // Predicated region
        $region17: #{tpu_custom_call.1} parent=11 // pred_check
          %p288 = pneg %p130
        $region18: #{tpu_custom_call.1} parent=11 // pred_check_branch
          %290 = sbr.rel (%p288) target = $region20
        $region19: #{tpu_custom_call.1} parent=11 // pred_region
          _
        $region20: #{tpu_custom_call.1} parent=11 // pred_fallthru
          _
        // Predicated region
        $region21: #{tpu_custom_call.1} parent=11 // pred_check
          %p291 = pneg %p151
        $region22: #{tpu_custom_call.1} parent=11 // pred_check_branch
          %293 = sbr.rel (%p291) target = $region24
        $region23: #{tpu_custom_call.1} parent=11 // pred_region
          _
        $region24: #{tpu_custom_call.1} parent=11 // pred_fallthru
          _
        // Predicated region
        $region25: #{tpu_custom_call.1} parent=11 // pred_check
          %p294 = pneg %p172
        $region26: #{tpu_custom_call.1} parent=11 // pred_check_branch
          %296 = sbr.rel (%p294) target = $region28
        $region27: #{tpu_custom_call.1} parent=11 // pred_region
          _
        $region28: #{tpu_custom_call.1} parent=11 // pred_fallthru
          _
        // Predicated region
        $region29: #{tpu_custom_call.1} parent=11 // pred_check
          %p297 = pneg %p193
        $region30: #{tpu_custom_call.1} parent=11 // pred_check_branch
          %299 = sbr.rel (%p297) target = $region32
        $region31: #{tpu_custom_call.1} parent=11 // pred_region
          _
        $region32: #{tpu_custom_call.1} parent=11 // pred_fallthru
          _
      $region12: #{tpu_custom_call.1} parent=5 // pred_fallthru
        _
      %p300 = scmp.lt.s32.totalorder %s20, 6
      // Predicated region
      $region33: #{tpu_custom_call.1} parent=5 // pred_check
        %p301 = pneg %p300
      $region34: #{tpu_custom_call.1} parent=5 // pred_check_branch
        %303 = sbr.rel (%p301) target = $region36
      $region35: #{tpu_custom_call.1} parent=5 // pred_region
        // Predicated region
        $region37: #{tpu_custom_call.1} parent=35 // pred_check
          %p304 = pneg %p52
        $region38: #{tpu_custom_call.1} parent=35 // pred_check_branch
          %306 = sbr.rel (%p304) target = $region40
        $region39: #{tpu_custom_call.1} parent=35 // pred_region
          %s307 = smul.u32 16, %s28
          %p308 = scmp.lt.s32.totalorder %s307, 47
          %s309 = scalar_select %p308, %s307, 47
          %s310 = smul.addr %s309, 4
          %s311 = scalar_lea.vmem %s0, %s310
          %s312 = smul.u32 16, %s28
        $region40: #{tpu_custom_call.1} parent=35 // pred_fallthru
          _
        // Predicated region
        $region41: #{tpu_custom_call.1} parent=35 // pred_check
          %p313 = pneg %p82
        $region42: #{tpu_custom_call.1} parent=35 // pred_check_branch
          %315 = sbr.rel (%p313) target = $region44
        $region43: #{tpu_custom_call.1} parent=35 // pred_region
          %s316 = ssub.s32 1, %s27
          %s317 = smul.u32 %s28, %s316
          %s318 = smul.u32 16, %s317
          %p319 = scmp.lt.s32.totalorder %s318, 47
          %s320 = scalar_select %p319, %s318, 47
          %s321 = smul.addr %s320, 4
          %s322 = scalar_lea.vmem %s1, %s321
          %s323 = ssub.s32 1, %s27
          %s324 = smul.u32 %s28, %s323
          %s325 = smul.u32 16, %s324
        $region44: #{tpu_custom_call.1} parent=35 // pred_fallthru
          _
        // Predicated region
        $region45: #{tpu_custom_call.1} parent=35 // pred_check
          %p326 = pneg %p215
        $region46: #{tpu_custom_call.1} parent=35 // pred_check_branch
          %328 = sbr.rel (%p326) target = $region48
        $region47: #{tpu_custom_call.1} parent=35 // pred_region
          %s329 = smul.u32 %s28, %s27
          %s330 = smul.u32 16, %s329
          %p331 = scmp.lt.s32.totalorder %s330, 47
          %s332 = scalar_select %p331, %s330, 47
          %s333 = smul.addr %s332, 8
          %s334 = scalar_lea.vmem %s7, %s333
          %s335 = smul.u32 %s28, %s27
          %s336 = smul.u32 16, %s335
        $region48: #{tpu_custom_call.1} parent=35 // pred_fallthru
          _
      $region36: #{tpu_custom_call.1} parent=5 // pred_fallthru
        _
      %p337 = scmp.le.s32.totalorder 1, %s20
      %p338 = scmp.lt.s32.totalorder %s20, 7
      %p339 = pnand %p337, %p338
      %p340 = pneg %p339
      // Predicated region
      $region49: #{tpu_custom_call.1} parent=5 // pred_check
        _
      $region50: #{tpu_custom_call.1} parent=5 // pred_check_branch
        %342 = sbr.rel (%p339) target = $region52
      $region51: #{tpu_custom_call.1} parent=5 // pred_region
        %s343 = ssub.s32 %s20, 1
        %s344 = smul.u32 16, %s30
        %p345 = scmp.lt.s32.totalorder %s344, 47
        %s346 = scalar_select %p345, %s344, 47
        %s347 = smul.addr %s346, 4
        %s348 = scalar_lea.vmem %s0, %s347
        %p349 = pneg %p58
        %p350 = pneg %p55
        %s351 = ssub.s32 1, %s29
        %s352 = smul.u32 %s30, %s351
        %s353 = smul.u32 16, %s352
        %p354 = scmp.lt.s32.totalorder %s353, 47
        %s355 = scalar_select %p354, %s353, 47
        %s356 = smul.addr %s355, 4
        %s357 = scalar_lea.vmem %s1, %s356
        %p358 = pneg %p88
        %p359 = pneg %p85
        %p360 = pneg %p109
        %p361 = pneg %p106
        %p362 = pneg %p130
        %p363 = pneg %p127
        %p364 = pneg %p151
        %p365 = pneg %p148
        %p366 = pneg %p172
        %p367 = pneg %p169
        %p368 = pneg %p193
        %p369 = pneg %p190
        %s370 = smul.u32 %s30, %s29
        %s371 = smul.u32 16, %s370
        %p372 = scmp.lt.s32.totalorder %s371, 47
        %s373 = scalar_select %p372, %s371, 47
        %s374 = smul.addr %s373, 8
        %s375 = scalar_lea.vmem %s7, %s374
        %p376 = pneg %p221
        %p377 = pneg %p218
        %p378 = pneg %p242
        %p379 = pneg %p239
        %p380 = pneg %p270
        %p381 = pneg %p267
        %s382 = sand.u32 %s257, 1
        %s383 = scalar_lea.sflag [#allocation6], %s382
        %s384 = sand.u32 %s257, 1
        %s385 = smul.addr %s384, 128
        %s386 = scalar_lea.vmem [#allocation5], %s385
        %s387 = smul.u32 16, %s30
        %p388 = scmp.lt.s32.totalorder %s387, 47
        %s389 = scalar_select %p388, %s387, 47
        %s390 = smul.addr %s389, 4
        %s391 = scalar_lea.vmem %s0, %s390
        %s392 = smul.u32 16, %s30
        %s393 = ssub.s32 1, %s29
        %s394 = smul.u32 %s30, %s393
        %s395 = smul.u32 16, %s394
        %p396 = scmp.lt.s32.totalorder %s395, 47
        %s397 = scalar_select %p396, %s395, 47
        %s398 = smul.addr %s397, 4
        %s399 = scalar_lea.vmem %s1, %s398
        %s400 = ssub.s32 1, %s29
        %s401 = smul.u32 %s30, %s400
        %s402 = smul.u32 16, %s401
        %s403 = smul.u32 %s30, %s29
        %s404 = smul.u32 16, %s403
        %p405 = scmp.lt.s32.totalorder %s404, 47
        %s406 = scalar_select %p405, %s404, 47
        %s407 = smul.addr %s406, 8
        %s408 = scalar_lea.vmem %s7, %s407
        %s409 = smul.u32 %s30, %s29
        %s410 = smul.u32 16, %s409
        %s411 = smul.u32 %s30, %s29
        %s412 = smul.u32 16, %s411
        %p414 = scmp.eq.s32.totalorder %s29, 0
        // Predicated region
        $region53: #{tpu_custom_call.1} parent=51 // pred_check
          %p415 = pneg %p414
        $region54: #{tpu_custom_call.1} parent=51 // pred_check_branch
          %417 = sbr.rel (%p415) target = $region56
        $region55: #{tpu_custom_call.1} parent=51 // pred_region
          %p418 = scmp.eq.s32.totalorder %s30, 0
          // Predicated region
          $region57: #{tpu_custom_call.1} parent=55 // pred_check
            %p419 = pneg %p418
          $region58: #{tpu_custom_call.1} parent=55 // pred_check_branch
            %421 = sbr.rel (%p419) target = $region60
          $region59: #{tpu_custom_call.1} parent=55 // pred_region
            %422 = vst [vmem:[#allocation3] sm:$0xff] 0.0
            %423 = vst [vmem:[#allocation3 + $0x8] sm:$0xff] 0.0
            %424 = vst [vmem:[#allocation3 + $0x10] sm:$0xff] 0.0
            %425 = vst [vmem:[#allocation3 + $0x18] sm:$0xff] 0.0
            %426 = vst [vmem:[#allocation3 + $0x20] sm:$0xff] 0.0
            %427 = vst [vmem:[#allocation3 + $0x28] sm:$0xff] 0.0
            %428 = vst [vmem:[#allocation3 + $0x30] sm:$0xff] 0.0
            %429 = vst [vmem:[#allocation3 + $0x38] sm:$0xff] 0.0
            %430 = vst [vmem:[#allocation3 + $0x40] sm:$0xff] 0.0
            %431 = vst [vmem:[#allocation3 + $0x48] sm:$0xff] 0.0
            %432 = vst [vmem:[#allocation3 + $0x50] sm:$0xff] 0.0
            %433 = vst [vmem:[#allocation3 + $0x58] sm:$0xff] 0.0
            %434 = vst [vmem:[#allocation3 + $0x60] sm:$0xff] 0.0
            %435 = vst [vmem:[#allocation3 + $0x68] sm:$0xff] 0.0
            %436 = vst [vmem:[#allocation3 + $0x70] sm:$0xff] 0.0
            %437 = vst [vmem:[#allocation3 + $0x78] sm:$0xff] 0.0
          $region60: #{tpu_custom_call.1} parent=55 // pred_fallthru
            _
          %v438 = vld [vmem:[%s399] sm:$0xf]
          %v439 = vld [vmem:[%s399 + $0x4] sm:$0xf]
          %v440 = vld [vmem:[%s399 + $0x8] sm:$0xf]
          %v441 = vld [vmem:[%s399 + $0xc] sm:$0xf]
          %v442 = vld [vmem:[%s399 + $0x10] sm:$0xf]
          %v443 = vld [vmem:[%s399 + $0x14] sm:$0xf]
          %v444 = vld [vmem:[%s399 + $0x18] sm:$0xf]
          %v445 = vld [vmem:[%s399 + $0x1c] sm:$0xf]
          %v446 = vld [vmem:[%s399 + $0x20] sm:$0xf]
          %v447 = vld [vmem:[%s399 + $0x24] sm:$0xf]
          %v448 = vld [vmem:[%s399 + $0x28] sm:$0xf]
          %v449 = vld [vmem:[%s399 + $0x2c] sm:$0xf]
          %v450 = vld [vmem:[%s399 + $0x30] sm:$0xf]
          %v451 = vld [vmem:[%s399 + $0x34] sm:$0xf]
          %v452 = vld [vmem:[%s399 + $0x38] sm:$0xf]
          %v453 = vld [vmem:[%s399 + $0x3c] sm:$0xf]
          %v454 = vld [vmem:[%s2] sm:$0xf]
          %v455 = vld [vmem:[%s2 + $0x4] sm:$0xf]
          %v456 = vld [vmem:[%s2 + $0x8] sm:$0xf]
          %v457 = vld [vmem:[%s2 + $0xc] sm:$0xf]
          %v458 = vld [vmem:[%s2 + $0x10] sm:$0xf]
          %v459 = vld [vmem:[%s2 + $0x14] sm:$0xf]
          %v460 = vld [vmem:[%s2 + $0x18] sm:$0xf]
          %v461 = vld [vmem:[%s2 + $0x1c] sm:$0xf]
          %v462 = vld [vmem:[%s2 + $0x20] sm:$0xf]
          %v463 = vld [vmem:[%s2 + $0x24] sm:$0xf]
          %v464 = vld [vmem:[%s2 + $0x28] sm:$0xf]
          %v465 = vld [vmem:[%s2 + $0x2c] sm:$0xf]
          %v466 = vld [vmem:[%s2 + $0x30] sm:$0xf]
          %v467 = vld [vmem:[%s2 + $0x34] sm:$0xf]
          %v468 = vld [vmem:[%s2 + $0x38] sm:$0xf]
          %v469 = vld [vmem:[%s2 + $0x3c] sm:$0xf]
          %v486 = vunpack.c.l.b16 %v438
          %v487 = vunpack.c.l.b16 %v439
          %v488 = vunpack.c.l.b16 %v440
          %v489 = vunpack.c.l.b16 %v441
          %v490 = vunpack.c.l.b16 %v442
          %v491 = vunpack.c.l.b16 %v443
          %v492 = vunpack.c.l.b16 %v444
          %v493 = vunpack.c.l.b16 %v445
          %v494 = vunpack.c.l.b16 %v446
          %v495 = vunpack.c.l.b16 %v447
          %v496 = vunpack.c.l.b16 %v448
          %v497 = vunpack.c.l.b16 %v449
          %v498 = vunpack.c.l.b16 %v450
          %v499 = vunpack.c.l.b16 %v451
          %v500 = vunpack.c.l.b16 %v452
          %v501 = vunpack.c.l.b16 %v453
          %v502 = vpack.c.b16 %v487, %v486
          %v503 = vpack.c.b16 %v489, %v488
          %v504 = vpack.c.b16 %v491, %v490
          %v505 = vpack.c.b16 %v493, %v492
          %v506 = vpack.c.b16 %v495, %v494
          %v507 = vpack.c.b16 %v497, %v496
          %v508 = vpack.c.b16 %v499, %v498
          %v509 = vpack.c.b16 %v501, %v500
          %v534 = vunpack.c.l.b16 %v454
          %v535 = vunpack.c.l.b16 %v455
          %v536 = vunpack.c.l.b16 %v456
          %v537 = vunpack.c.l.b16 %v457
          %v538 = vunpack.c.l.b16 %v458
          %v539 = vunpack.c.l.b16 %v459
          %v540 = vunpack.c.l.b16 %v460
          %v541 = vunpack.c.l.b16 %v461
          %v542 = vunpack.c.l.b16 %v462
          %v543 = vunpack.c.l.b16 %v463
          %v544 = vunpack.c.l.b16 %v464
          %v545 = vunpack.c.l.b16 %v465
          %v546 = vunpack.c.l.b16 %v466
          %v547 = vunpack.c.l.b16 %v467
          %v548 = vunpack.c.l.b16 %v468
          %v549 = vunpack.c.l.b16 %v469
          %v550 = vpack.c.b16 %v535, %v534
          %v551 = vpack.c.b16 %v537, %v536
          %v552 = vpack.c.b16 %v539, %v538
          %v553 = vpack.c.b16 %v541, %v540
          %v554 = vpack.c.b16 %v543, %v542
          %v555 = vpack.c.b16 %v545, %v544
          %v556 = vpack.c.b16 %v547, %v546
          %v557 = vpack.c.b16 %v549, %v548
          %566 = vmatprep.subr.bf16.mxu0 0
          %567 = vmatpush1.bf16.msra.mxu0 %v550
          %568 = vmatprep.subr.bf16.mxu0 0
          %569 = vmatpush1.bf16.msra.mxu0 %v551
          %570 = vmatprep.subr.bf16.mxu0 0
          %571 = vmatpush1.bf16.msra.mxu0 %v552
          %572 = vmatprep.subr.bf16.mxu0 0
          %573 = vmatpush1.bf16.msra.mxu0 %v553
          %574 = vmatprep.subr.bf16.mxu0 0
          %575 = vmatpush1.bf16.msra.mxu0 %v554
          %576 = vmatprep.subr.bf16.mxu0 0
          %577 = vmatpush1.bf16.msra.mxu0 %v555
          %578 = vmatprep.subr.bf16.mxu0 0
          %579 = vmatpush1.bf16.msra.mxu0 %v556
          %580 = vmatprep.subr.bf16.mxu0 0
          %581 = vmatpush1.bf16.msra.mxu0 %v557
          %582 = vmatprep.subr.bf16.mxu0 0
          %583 = vmatpush1.bf16.msra.mxu0 0
          %584 = vmatprep.subr.bf16.mxu0 0
          %585 = vmatpush1.bf16.msra.mxu0 0
          %586 = vmatprep.subr.bf16.mxu0 0
          %587 = vmatpush1.bf16.msra.mxu0 0
          %588 = vmatprep.subr.bf16.mxu0 0
          %589 = vmatpush1.bf16.msra.mxu0 0
          %590 = vmatprep.subr.bf16.mxu0 0
          %591 = vmatpush1.bf16.msra.mxu0 0
          %592 = vmatprep.subr.bf16.mxu0 0
          %593 = vmatpush1.bf16.msra.mxu0 0
          %594 = vmatprep.subr.bf16.mxu0 0
          %595 = vmatpush1.bf16.msra.mxu0 0
          %596 = vmatprep.subr.bf16.mxu0 0
          %597 = vmatpush1.bf16.msra.mxu0 0
          %598 = vmatprep.mubr.bf16.mxu0 0
          %599 = vmatmul.mubr.bf16.gmra.mrb[0].mxu0 %v502
          %v600 = vpop.f32.mrb[0].mxu0
          %v601 = vadd.f32 0.0, %v600
          %v602 = vpop.f32.mrb[0].mxu0
          %v603 = vpop.f32.mrb[0].mxu0
          %v604 = vadd.f32 0.0, %v603
          %v605 = vpop.f32.mrb[0].mxu0
          %606 = vmatprep.mubr.bf16.mxu0 0
          %607 = vmatmul.mubr.bf16.gmra.mrb[0].mxu0 %v503
          %v608 = vpop.f32.mrb[0].mxu0
          %v609 = vadd.f32 0.0, %v608
          %v610 = vpop.f32.mrb[0].mxu0
          %v611 = vpop.f32.mrb[0].mxu0
          %v612 = vadd.f32 0.0, %v611
          %v613 = vpop.f32.mrb[0].mxu0
          %614 = vmatprep.mubr.bf16.mxu0 0
          %615 = vmatmul.mubr.bf16.gmra.mrb[0].mxu0 %v504
          %v616 = vpop.f32.mrb[0].mxu0
          %v617 = vadd.f32 0.0, %v616
          %v618 = vpop.f32.mrb[0].mxu0
          %v619 = vpop.f32.mrb[0].mxu0
          %v620 = vadd.f32 0.0, %v619
          %v621 = vpop.f32.mrb[0].mxu0
          %622 = vmatprep.mubr.bf16.mxu0 0
          %623 = vmatmul.mubr.bf16.gmra.mrb[0].mxu0 %v505
          %v624 = vpop.f32.mrb[0].mxu0
          %v625 = vadd.f32 0.0, %v624
          %v626 = vpop.f32.mrb[0].mxu0
          %v627 = vpop.f32.mrb[0].mxu0
          %v628 = vadd.f32 0.0, %v627
          %v629 = vpop.f32.mrb[0].mxu0
          %630 = vmatprep.mubr.bf16.mxu0 0
          %631 = vmatmul.mubr.bf16.gmra.mrb[0].mxu0 %v506
          %v632 = vpop.f32.mrb[0].mxu0
          %v633 = vadd.f32 0.0, %v632
          %v634 = vpop.f32.mrb[0].mxu0
          %v635 = vpop.f32.mrb[0].mxu0
          %v636 = vadd.f32 0.0, %v635
          %v637 = vpop.f32.mrb[0].mxu0
          %638 = vmatprep.mubr.bf16.mxu0 0
          %639 = vmatmul.mubr.bf16.gmra.mrb[0].mxu0 %v507
          %v640 = vpop.f32.mrb[0].mxu0
          %v641 = vadd.f32 0.0, %v640
          %v642 = vpop.f32.mrb[0].mxu0
          %v643 = vpop.f32.mrb[0].mxu0
          %v644 = vadd.f32 0.0, %v643
          %v645 = vpop.f32.mrb[0].mxu0
          %646 = vmatprep.mubr.bf16.mxu0 0
          %647 = vmatmul.mubr.bf16.gmra.mrb[0].mxu0 %v508
          %v648 = vpop.f32.mrb[0].mxu0
          %v649 = vadd.f32 0.0, %v648
          %v650 = vpop.f32.mrb[0].mxu0
          %v651 = vpop.f32.mrb[0].mxu0
          %v652 = vadd.f32 0.0, %v651
          %v653 = vpop.f32.mrb[0].mxu0
          %654 = vmatprep.mubr.bf16.mxu0 0
          %655 = vmatmul.mubr.bf16.gmra.mrb[0].mxu0 %v509
          %v656 = vpop.f32.mrb[0].mxu0
          %v657 = vadd.f32 0.0, %v656
          %v658 = vpop.f32.mrb[0].mxu0
          %v659 = vpop.f32.mrb[0].mxu0
          %v660 = vadd.f32 0.0, %v659
          %v661 = vpop.f32.mrb[0].mxu0
          %662 = vdwg.mxu0
          %v663 = vpack.c.bf16 %v604, %v601
          %v664 = vpack.c.bf16 %v612, %v609
          %v665 = vpack.c.bf16 %v620, %v617
          %v666 = vpack.c.bf16 %v628, %v625
          %v667 = vpack.c.bf16 %v636, %v633
          %v668 = vpack.c.bf16 %v644, %v641
          %v669 = vpack.c.bf16 %v652, %v649
          %v670 = vpack.c.bf16 %v660, %v657
          %v671 = vld [vmem:[#allocation3] sm:$0xff]
          %v672 = vld [vmem:[#allocation3 + $0x8] sm:$0xff]
          %v673 = vld [vmem:[#allocation3 + $0x10] sm:$0xff]
          %v674 = vld [vmem:[#allocation3 + $0x18] sm:$0xff]
          %v675 = vld [vmem:[#allocation3 + $0x20] sm:$0xff]
          %v676 = vld [vmem:[#allocation3 + $0x28] sm:$0xff]
          %v677 = vld [vmem:[#allocation3 + $0x30] sm:$0xff]
          %v678 = vld [vmem:[#allocation3 + $0x38] sm:$0xff]
          %v679 = vld [vmem:[#allocation3 + $0x40] sm:$0xff]
          %v680 = vld [vmem:[#allocation3 + $0x48] sm:$0xff]
          %v681 = vld [vmem:[#allocation3 + $0x50] sm:$0xff]
          %v682 = vld [vmem:[#allocation3 + $0x58] sm:$0xff]
          %v683 = vld [vmem:[#allocation3 + $0x60] sm:$0xff]
          %v684 = vld [vmem:[#allocation3 + $0x68] sm:$0xff]
          %v685 = vld [vmem:[#allocation3 + $0x70] sm:$0xff]
          %v686 = vld [vmem:[#allocation3 + $0x78] sm:$0xff]
          %v687 = vld [vmem:[%s391] sm:$0xf]
          %v688 = vld [vmem:[%s391 + $0x4] sm:$0xf]
          %v689 = vld [vmem:[%s391 + $0x8] sm:$0xf]
          %v690 = vld [vmem:[%s391 + $0xc] sm:$0xf]
          %v691 = vld [vmem:[%s391 + $0x10] sm:$0xf]
          %v692 = vld [vmem:[%s391 + $0x14] sm:$0xf]
          %v693 = vld [vmem:[%s391 + $0x18] sm:$0xf]
          %v694 = vld [vmem:[%s391 + $0x1c] sm:$0xf]
          %v695 = vld [vmem:[%s391 + $0x20] sm:$0xf]
          %v696 = vld [vmem:[%s391 + $0x24] sm:$0xf]
          %v697 = vld [vmem:[%s391 + $0x28] sm:$0xf]
          %v698 = vld [vmem:[%s391 + $0x2c] sm:$0xf]
          %v699 = vld [vmem:[%s391 + $0x30] sm:$0xf]
          %v700 = vld [vmem:[%s391 + $0x34] sm:$0xf]
          %v701 = vld [vmem:[%s391 + $0x38] sm:$0xf]
          %v702 = vld [vmem:[%s391 + $0x3c] sm:$0xf]
          %v719 = vunpack.c.l.b16 %v687
          %v720 = vunpack.c.l.b16 %v688
          %v721 = vunpack.c.l.b16 %v689
          %v722 = vunpack.c.l.b16 %v690
          %v723 = vunpack.c.l.b16 %v691
          %v724 = vunpack.c.l.b16 %v692
          %v725 = vunpack.c.l.b16 %v693
          %v726 = vunpack.c.l.b16 %v694
          %v727 = vunpack.c.l.b16 %v695
          %v728 = vunpack.c.l.b16 %v696
          %v729 = vunpack.c.l.b16 %v697
          %v730 = vunpack.c.l.b16 %v698
          %v731 = vunpack.c.l.b16 %v699
          %v732 = vunpack.c.l.b16 %v700
          %v733 = vunpack.c.l.b16 %v701
          %v734 = vunpack.c.l.b16 %v702
          %v735 = vpack.c.b16 %v720, %v719
          %v736 = vpack.c.b16 %v722, %v721
          %v737 = vpack.c.b16 %v724, %v723
          %v738 = vpack.c.b16 %v726, %v725
          %v739 = vpack.c.b16 %v728, %v727
          %v740 = vpack.c.b16 %v730, %v729
          %v741 = vpack.c.b16 %v732, %v731
          %v742 = vpack.c.b16 %v734, %v733
          %751 = vxpose.xlu0.c.b16.start [1/8] %v735, 128
          %752 = vxpose.xlu0.c.b16.cont [2/8] %v736, 128
          %753 = vxpose.xlu0.c.b16.cont [3/8] %v737, 128
          %754 = vxpose.xlu0.c.b16.cont [4/8] %v738, 128
          %755 = vxpose.xlu0.c.b16.cont [5/8] %v739, 128
          %756 = vxpose.xlu0.c.b16.cont [6/8] %v740, 128
          %757 = vxpose.xlu0.c.b16.cont [7/8] %v741, 128
          %758 = vxpose.xlu0.c.b16.end [8/8] %v742, 128
          %v759 = vpop.trf.xlu0
          %v760 = vpop.trf.xlu0
          %v761 = vpop.trf.xlu0
          %v762 = vpop.trf.xlu0
          %v763 = vpop.trf.xlu0
          %v764 = vpop.trf.xlu0
          %v765 = vpop.trf.xlu0
          %v766 = vpop.trf.xlu0
          %767 = vmatprep.subr.bf16.mxu0 0
          %768 = vmatpush1.bf16.msra.mxu0 %v663
          %769 = vmatprep.subr.bf16.mxu0 0
          %770 = vmatpush1.bf16.msra.mxu0 %v664
          %771 = vmatprep.subr.bf16.mxu0 0
          %772 = vmatpush1.bf16.msra.mxu0 %v665
          %773 = vmatprep.subr.bf16.mxu0 0
          %774 = vmatpush1.bf16.msra.mxu0 %v666
          %775 = vmatprep.subr.bf16.mxu0 0
          %776 = vmatpush1.bf16.msra.mxu0 %v667
          %777 = vmatprep.subr.bf16.mxu0 0
          %778 = vmatpush1.bf16.msra.mxu0 %v668
          %779 = vmatprep.subr.bf16.mxu0 0
          %780 = vmatpush1.bf16.msra.mxu0 %v669
          %781 = vmatprep.subr.bf16.mxu0 0
          %782 = vmatpush1.bf16.msra.mxu0 %v670
          %783 = vmatprep.subr.bf16.mxu0 0
          %784 = vmatpush1.bf16.msra.mxu0 0
          %785 = vmatprep.subr.bf16.mxu0 0
          %786 = vmatpush1.bf16.msra.mxu0 0
          %787 = vmatprep.subr.bf16.mxu0 0
          %788 = vmatpush1.bf16.msra.mxu0 0
          %789 = vmatprep.subr.bf16.mxu0 0
          %790 = vmatpush1.bf16.msra.mxu0 0
          %791 = vmatprep.subr.bf16.mxu0 0
          %792 = vmatpush1.bf16.msra.mxu0 0
          %793 = vmatprep.subr.bf16.mxu0 0
          %794 = vmatpush1.bf16.msra.mxu0 0
          %795 = vmatprep.subr.bf16.mxu0 0
          %796 = vmatpush1.bf16.msra.mxu0 0
          %797 = vmatprep.subr.bf16.mxu0 0
          %798 = vmatpush1.bf16.msra.mxu0 0
          %799 = vmatprep.mubr.bf16.mxu0 0
          %800 = vmatmul.mubr.bf16.gmra.mrb[0].mxu0 %v759
          %v801 = vpop.f32.mrb[0].mxu0
          %v802 = vadd.f32 0.0, %v801
          %v803 = vpop.f32.mrb[0].mxu0
          %v804 = vpop.f32.mrb[0].mxu0
          %v805 = vadd.f32 0.0, %v804
          %v806 = vpop.f32.mrb[0].mxu0
          %807 = vmatprep.mubr.bf16.mxu0 0
          %808 = vmatmul.mubr.bf16.gmra.mrb[0].mxu0 %v760
          %v809 = vpop.f32.mrb[0].mxu0
          %v810 = vadd.f32 0.0, %v809
          %v811 = vpop.f32.mrb[0].mxu0
          %v812 = vpop.f32.mrb[0].mxu0
          %v813 = vadd.f32 0.0, %v812
          %v814 = vpop.f32.mrb[0].mxu0
          %815 = vmatprep.mubr.bf16.mxu0 0
          %816 = vmatmul.mubr.bf16.gmra.mrb[0].mxu0 %v761
          %v817 = vpop.f32.mrb[0].mxu0
          %v818 = vadd.f32 0.0, %v817
          %v819 = vpop.f32.mrb[0].mxu0
          %v820 = vpop.f32.mrb[0].mxu0
          %v821 = vadd.f32 0.0, %v820
          %v822 = vpop.f32.mrb[0].mxu0
          %823 = vmatprep.mubr.bf16.mxu0 0
          %824 = vmatmul.mubr.bf16.gmra.mrb[0].mxu0 %v762
          %v825 = vpop.f32.mrb[0].mxu0
          %v826 = vadd.f32 0.0, %v825
          %v827 = vpop.f32.mrb[0].mxu0
          %v828 = vpop.f32.mrb[0].mxu0
          %v829 = vadd.f32 0.0, %v828
          %v830 = vpop.f32.mrb[0].mxu0
          %831 = vmatprep.mubr.bf16.mxu0 0
          %832 = vmatmul.mubr.bf16.gmra.mrb[0].mxu0 %v763
          %v833 = vpop.f32.mrb[0].mxu0
          %v834 = vadd.f32 0.0, %v833
          %v835 = vpop.f32.mrb[0].mxu0
          %v836 = vpop.f32.mrb[0].mxu0
          %v837 = vadd.f32 0.0, %v836
          %v838 = vpop.f32.mrb[0].mxu0
          %839 = vmatprep.mubr.bf16.mxu0 0
          %840 = vmatmul.mubr.bf16.gmra.mrb[0].mxu0 %v764
          %v841 = vpop.f32.mrb[0].mxu0
          %v842 = vadd.f32 0.0, %v841
          %v843 = vpop.f32.mrb[0].mxu0
          %v844 = vpop.f32.mrb[0].mxu0
          %v845 = vadd.f32 0.0, %v844
          %v846 = vpop.f32.mrb[0].mxu0
          %847 = vmatprep.mubr.bf16.mxu0 0
          %848 = vmatmul.mubr.bf16.gmra.mrb[0].mxu0 %v765
          %v849 = vpop.f32.mrb[0].mxu0
          %v850 = vadd.f32 0.0, %v849
          %v851 = vpop.f32.mrb[0].mxu0
          %v852 = vpop.f32.mrb[0].mxu0
          %v853 = vadd.f32 0.0, %v852
          %v854 = vpop.f32.mrb[0].mxu0
          %855 = vmatprep.mubr.bf16.mxu0 0
          %856 = vmatmul.mubr.bf16.gmra.mrb[0].mxu0 %v766
          %v857 = vpop.f32.mrb[0].mxu0
          %v858 = vadd.f32 0.0, %v857
          %v859 = vpop.f32.mrb[0].mxu0
          %v860 = vpop.f32.mrb[0].mxu0
          %v861 = vadd.f32 0.0, %v860
          %v862 = vpop.f32.mrb[0].mxu0
          %863 = vdwg.mxu0
          %v864 = vadd.f32 %v671, %v802
          %v865 = vadd.f32 %v672, %v805
          %v866 = vadd.f32 %v673, %v810
          %v867 = vadd.f32 %v674, %v813
          %v868 = vadd.f32 %v675, %v818
          %v869 = vadd.f32 %v676, %v821
          %v870 = vadd.f32 %v677, %v826
          %v871 = vadd.f32 %v678, %v829
          %v872 = vadd.f32 %v679, %v834
          %v873 = vadd.f32 %v680, %v837
          %v874 = vadd.f32 %v681, %v842
          %v875 = vadd.f32 %v682, %v845
          %v876 = vadd.f32 %v683, %v850
          %v877 = vadd.f32 %v684, %v853
          %v878 = vadd.f32 %v685, %v858
          %v879 = vadd.f32 %v686, %v861
          %880 = vst [vmem:[#allocation3] sm:$0xff] %v864
          %881 = vst [vmem:[#allocation3 + $0x8] sm:$0xff] %v865
          %882 = vst [vmem:[#allocation3 + $0x10] sm:$0xff] %v866
          %883 = vst [vmem:[#allocation3 + $0x18] sm:$0xff] %v867
          %884 = vst [vmem:[#allocation3 + $0x20] sm:$0xff] %v868
          %885 = vst [vmem:[#allocation3 + $0x28] sm:$0xff] %v869
          %886 = vst [vmem:[#allocation3 + $0x30] sm:$0xff] %v870
          %887 = vst [vmem:[#allocation3 + $0x38] sm:$0xff] %v871
          %888 = vst [vmem:[#allocation3 + $0x40] sm:$0xff] %v872
          %889 = vst [vmem:[#allocation3 + $0x48] sm:$0xff] %v873
          %890 = vst [vmem:[#allocation3 + $0x50] sm:$0xff] %v874
          %891 = vst [vmem:[#allocation3 + $0x58] sm:$0xff] %v875
          %892 = vst [vmem:[#allocation3 + $0x60] sm:$0xff] %v876
          %893 = vst [vmem:[#allocation3 + $0x68] sm:$0xff] %v877
          %894 = vst [vmem:[#allocation3 + $0x70] sm:$0xff] %v878
          %895 = vst [vmem:[#allocation3 + $0x78] sm:$0xff] %v879
          %p896 = scmp.eq.s32.totalorder %s30, 2
          // Predicated region
          $region61: #{tpu_custom_call.1} parent=55 // pred_check
            %p897 = pneg %p896
          $region62: #{tpu_custom_call.1} parent=55 // pred_check_branch
            %899 = sbr.rel (%p897) target = $region64
          $region63: #{tpu_custom_call.1} parent=55 // pred_region
            %v900 = vld [vmem:[#allocation3] sm:$0xff]
            %v901 = vld [vmem:[#allocation3 + $0x8] sm:$0xff]
            %v902 = vld [vmem:[#allocation3 + $0x10] sm:$0xff]
            %v903 = vld [vmem:[#allocation3 + $0x18] sm:$0xff]
            %v904 = vld [vmem:[#allocation3 + $0x20] sm:$0xff]
            %v905 = vld [vmem:[#allocation3 + $0x28] sm:$0xff]
            %v906 = vld [vmem:[#allocation3 + $0x30] sm:$0xff]
            %v907 = vld [vmem:[#allocation3 + $0x38] sm:$0xff]
            %v908 = vld [vmem:[#allocation3 + $0x40] sm:$0xff]
            %v909 = vld [vmem:[#allocation3 + $0x48] sm:$0xff]
            %v910 = vld [vmem:[#allocation3 + $0x50] sm:$0xff]
            %v911 = vld [vmem:[#allocation3 + $0x58] sm:$0xff]
            %v912 = vld [vmem:[#allocation3 + $0x60] sm:$0xff]
            %v913 = vld [vmem:[#allocation3 + $0x68] sm:$0xff]
            %v914 = vld [vmem:[#allocation3 + $0x70] sm:$0xff]
            %v915 = vld [vmem:[#allocation3 + $0x78] sm:$0xff]
            %v916 = vld [vmem:[%s6] sm:$0xff]
            %v917 = vld [vmem:[%s6 + $0x8] sm:$0xff]
            %v918 = vld [vmem:[%s6 + $0x10] sm:$0xff]
            %v919 = vld [vmem:[%s6 + $0x18] sm:$0xff]
            %v920 = vld [vmem:[%s6 + $0x20] sm:$0xff]
            %v921 = vld [vmem:[%s6 + $0x28] sm:$0xff]
            %v922 = vld [vmem:[%s6 + $0x30] sm:$0xff]
            %v923 = vld [vmem:[%s6 + $0x38] sm:$0xff]
            %v924 = vld [vmem:[%s6 + $0x40] sm:$0xff]
            %v925 = vld [vmem:[%s6 + $0x48] sm:$0xff]
            %v926 = vld [vmem:[%s6 + $0x50] sm:$0xff]
            %v927 = vld [vmem:[%s6 + $0x58] sm:$0xff]
            %v928 = vld [vmem:[%s6 + $0x60] sm:$0xff]
            %v929 = vld [vmem:[%s6 + $0x68] sm:$0xff]
            %v930 = vld [vmem:[%s6 + $0x70] sm:$0xff]
            %v931 = vld [vmem:[%s6 + $0x78] sm:$0xff]
            %933 = vset.pattern.permute.xlu0 0
            %934 = vperm.xlu0 %933, %v916
            %v935 = vpop.permute.xlu0 %934
            %938 = vset.pattern.permute.xlu0 0
            %939 = vperm.xlu0 %938, %v917
            %v940 = vpop.permute.xlu0 %939
            %943 = vset.pattern.permute.xlu0 0
            %944 = vperm.xlu0 %943, %v918
            %v945 = vpop.permute.xlu0 %944
            %948 = vset.pattern.permute.xlu0 0
            %949 = vperm.xlu0 %948, %v919
            %v950 = vpop.permute.xlu0 %949
            %953 = vset.pattern.permute.xlu0 0
            %954 = vperm.xlu0 %953, %v920
            %v955 = vpop.permute.xlu0 %954
            %958 = vset.pattern.permute.xlu0 0
            %959 = vperm.xlu0 %958, %v921
            %v960 = vpop.permute.xlu0 %959
            %963 = vset.pattern.permute.xlu0 0
            %964 = vperm.xlu0 %963, %v922
            %v965 = vpop.permute.xlu0 %964
            %968 = vset.pattern.permute.xlu0 0
            %969 = vperm.xlu0 %968, %v923
            %v970 = vpop.permute.xlu0 %969
            %973 = vset.pattern.permute.xlu0 0
            %974 = vperm.xlu0 %973, %v924
            %v975 = vpop.permute.xlu0 %974
            %978 = vset.pattern.permute.xlu0 0
            %979 = vperm.xlu0 %978, %v925
            %v980 = vpop.permute.xlu0 %979
            %983 = vset.pattern.permute.xlu0 0
            %984 = vperm.xlu0 %983, %v926
            %v985 = vpop.permute.xlu0 %984
            %988 = vset.pattern.permute.xlu0 0
            %989 = vperm.xlu0 %988, %v927
            %v990 = vpop.permute.xlu0 %989
            %993 = vset.pattern.permute.xlu0 0
            %994 = vperm.xlu0 %993, %v928
            %v995 = vpop.permute.xlu0 %994
            %998 = vset.pattern.permute.xlu0 0
            %999 = vperm.xlu0 %998, %v929
            %v1000 = vpop.permute.xlu0 %999
            %1003 = vset.pattern.permute.xlu0 0
            %1004 = vperm.xlu0 %1003, %v930
            %v1005 = vpop.permute.xlu0 %1004
            %1008 = vset.pattern.permute.xlu0 0
            %1009 = vperm.xlu0 %1008, %v931
            %v1010 = vpop.permute.xlu0 %1009
            %v1012 = vmul.f32 %v900, %v935
            %v1013 = vmul.f32 %v901, %v940
            %v1014 = vmul.f32 %v902, %v945
            %v1015 = vmul.f32 %v903, %v950
            %v1016 = vmul.f32 %v904, %v955
            %v1017 = vmul.f32 %v905, %v960
            %v1018 = vmul.f32 %v906, %v965
            %v1019 = vmul.f32 %v907, %v970
            %v1020 = vmul.f32 %v908, %v975
            %v1021 = vmul.f32 %v909, %v980
            %v1022 = vmul.f32 %v910, %v985
            %v1023 = vmul.f32 %v911, %v990
            %v1024 = vmul.f32 %v912, %v995
            %v1025 = vmul.f32 %v913, %v1000
            %v1026 = vmul.f32 %v914, %v1005
            %v1027 = vmul.f32 %v915, %v1010
            %v1028 = vld [vmem:[%s3] sm:$0x1]
            %v1030 = vlaneseq
            %v1031 = vshrl.u32 %v1030, 7
            %v1032 = vsub.s32 0, %v1031
            %v1033 = vrot.slane %v1028, %v1032
            %v1035 = vadd.f32 %v1012, %v1033
            %v1036 = vadd.f32 %v1013, %v1033
            %v1037 = vadd.f32 %v1014, %v1033
            %v1038 = vadd.f32 %v1015, %v1033
            %v1039 = vadd.f32 %v1016, %v1033
            %v1040 = vadd.f32 %v1017, %v1033
            %v1041 = vadd.f32 %v1018, %v1033
            %v1042 = vadd.f32 %v1019, %v1033
            %v1043 = vadd.f32 %v1020, %v1033
            %v1044 = vadd.f32 %v1021, %v1033
            %v1045 = vadd.f32 %v1022, %v1033
            %v1046 = vadd.f32 %v1023, %v1033
            %v1047 = vadd.f32 %v1024, %v1033
            %v1048 = vadd.f32 %v1025, %v1033
            %v1049 = vadd.f32 %v1026, %v1033
            %v1050 = vadd.f32 %v1027, %v1033
            %vm1051 = vcmp.ge.f32.partialorder %v1035, 0.0
            %vm1052 = vcmp.ge.f32.partialorder %v1036, 0.0
            %vm1053 = vcmp.ge.f32.partialorder %v1037, 0.0
            %vm1054 = vcmp.ge.f32.partialorder %v1038, 0.0
            %vm1055 = vcmp.ge.f32.partialorder %v1039, 0.0
            %vm1056 = vcmp.ge.f32.partialorder %v1040, 0.0
            %vm1057 = vcmp.ge.f32.partialorder %v1041, 0.0
            %vm1058 = vcmp.ge.f32.partialorder %v1042, 0.0
            %vm1059 = vcmp.ge.f32.partialorder %v1043, 0.0
            %vm1060 = vcmp.ge.f32.partialorder %v1044, 0.0
            %vm1061 = vcmp.ge.f32.partialorder %v1045, 0.0
            %vm1062 = vcmp.ge.f32.partialorder %v1046, 0.0
            %vm1063 = vcmp.ge.f32.partialorder %v1047, 0.0
            %vm1064 = vcmp.ge.f32.partialorder %v1048, 0.0
            %vm1065 = vcmp.ge.f32.partialorder %v1049, 0.0
            %vm1066 = vcmp.ge.f32.partialorder %v1050, 0.0
            %v1067 = vmul.f32 %v1035, 0.25
            %v1068 = vmul.f32 %v1036, 0.25
            %v1069 = vmul.f32 %v1037, 0.25
            %v1070 = vmul.f32 %v1038, 0.25
            %v1071 = vmul.f32 %v1039, 0.25
            %v1072 = vmul.f32 %v1040, 0.25
            %v1073 = vmul.f32 %v1041, 0.25
            %v1074 = vmul.f32 %v1042, 0.25
            %v1075 = vmul.f32 %v1043, 0.25
            %v1076 = vmul.f32 %v1044, 0.25
            %v1077 = vmul.f32 %v1045, 0.25
            %v1078 = vmul.f32 %v1046, 0.25
            %v1079 = vmul.f32 %v1047, 0.25
            %v1080 = vmul.f32 %v1048, 0.25
            %v1081 = vmul.f32 %v1049, 0.25
            %v1082 = vmul.f32 %v1050, 0.25
            %v1083 = vsel %vm1051, %v1035, %v1067
            %v1084 = vsel %vm1052, %v1036, %v1068
            %v1085 = vsel %vm1053, %v1037, %v1069
            %v1086 = vsel %vm1054, %v1038, %v1070
            %v1087 = vsel %vm1055, %v1039, %v1071
            %v1088 = vsel %vm1056, %v1040, %v1072
            %v1089 = vsel %vm1057, %v1041, %v1073
            %v1090 = vsel %vm1058, %v1042, %v1074
            %v1091 = vsel %vm1059, %v1043, %v1075
            %v1092 = vsel %vm1060, %v1044, %v1076
            %v1093 = vsel %vm1061, %v1045, %v1077
            %v1094 = vsel %vm1062, %v1046, %v1078
            %v1095 = vsel %vm1063, %v1047, %v1079
            %v1096 = vsel %vm1064, %v1048, %v1080
            %v1097 = vsel %vm1065, %v1049, %v1081
            %v1098 = vsel %vm1066, %v1050, %v1082
            %1099 = vst [vmem:[#allocation3] sm:$0xff] %v1083
            %1100 = vst [vmem:[#allocation3 + $0x8] sm:$0xff] %v1084
            %1101 = vst [vmem:[#allocation3 + $0x10] sm:$0xff] %v1085
            %1102 = vst [vmem:[#allocation3 + $0x18] sm:$0xff] %v1086
            %1103 = vst [vmem:[#allocation3 + $0x20] sm:$0xff] %v1087
            %1104 = vst [vmem:[#allocation3 + $0x28] sm:$0xff] %v1088
            %1105 = vst [vmem:[#allocation3 + $0x30] sm:$0xff] %v1089
            %1106 = vst [vmem:[#allocation3 + $0x38] sm:$0xff] %v1090
            %1107 = vst [vmem:[#allocation3 + $0x40] sm:$0xff] %v1091
            %1108 = vst [vmem:[#allocation3 + $0x48] sm:$0xff] %v1092
            %1109 = vst [vmem:[#allocation3 + $0x50] sm:$0xff] %v1093
            %1110 = vst [vmem:[#allocation3 + $0x58] sm:$0xff] %v1094
            %1111 = vst [vmem:[#allocation3 + $0x60] sm:$0xff] %v1095
            %1112 = vst [vmem:[#allocation3 + $0x68] sm:$0xff] %v1096
            %1113 = vst [vmem:[#allocation3 + $0x70] sm:$0xff] %v1097
            %1114 = vst [vmem:[#allocation3 + $0x78] sm:$0xff] %v1098
            %v1115 = vpack.c.bf16 %v1084, %v1083
            %v1116 = vpack.c.bf16 %v1086, %v1085
            %v1117 = vpack.c.bf16 %v1088, %v1087
            %v1118 = vpack.c.bf16 %v1090, %v1089
            %v1119 = vpack.c.bf16 %v1092, %v1091
            %v1120 = vpack.c.bf16 %v1094, %v1093
            %v1121 = vpack.c.bf16 %v1096, %v1095
            %v1122 = vpack.c.bf16 %v1098, %v1097
            %v1123 = vld [vmem:[%s4] sm:$0xf]
            %v1124 = vld [vmem:[%s4 + $0x4] sm:$0xf]
            %v1125 = vld [vmem:[%s4 + $0x8] sm:$0xf]
            %v1126 = vld [vmem:[%s4 + $0xc] sm:$0xf]
            %v1127 = vld [vmem:[%s4 + $0x10] sm:$0xf]
            %v1128 = vld [vmem:[%s4 + $0x14] sm:$0xf]
            %v1129 = vld [vmem:[%s4 + $0x18] sm:$0xf]
            %v1130 = vld [vmem:[%s4 + $0x1c] sm:$0xf]
            %v1131 = vld [vmem:[%s4 + $0x20] sm:$0xf]
            %v1132 = vld [vmem:[%s4 + $0x24] sm:$0xf]
            %v1133 = vld [vmem:[%s4 + $0x28] sm:$0xf]
            %v1134 = vld [vmem:[%s4 + $0x2c] sm:$0xf]
            %v1135 = vld [vmem:[%s4 + $0x30] sm:$0xf]
            %v1136 = vld [vmem:[%s4 + $0x34] sm:$0xf]
            %v1137 = vld [vmem:[%s4 + $0x38] sm:$0xf]
            %v1138 = vld [vmem:[%s4 + $0x3c] sm:$0xf]
            %v1155 = vunpack.c.l.b16 %v1123
            %v1156 = vunpack.c.l.b16 %v1124
            %v1157 = vunpack.c.l.b16 %v1125
            %v1158 = vunpack.c.l.b16 %v1126
            %v1159 = vunpack.c.l.b16 %v1127
            %v1160 = vunpack.c.l.b16 %v1128
            %v1161 = vunpack.c.l.b16 %v1129
            %v1162 = vunpack.c.l.b16 %v1130
            %v1163 = vunpack.c.l.b16 %v1131
            %v1164 = vunpack.c.l.b16 %v1132
            %v1165 = vunpack.c.l.b16 %v1133
            %v1166 = vunpack.c.l.b16 %v1134
            %v1167 = vunpack.c.l.b16 %v1135
            %v1168 = vunpack.c.l.b16 %v1136
            %v1169 = vunpack.c.l.b16 %v1137
            %v1170 = vunpack.c.l.b16 %v1138
            %v1171 = vpack.c.b16 %v1156, %v1155
            %v1172 = vpack.c.b16 %v1158, %v1157
            %v1173 = vpack.c.b16 %v1160, %v1159
            %v1174 = vpack.c.b16 %v1162, %v1161
            %v1175 = vpack.c.b16 %v1164, %v1163
            %v1176 = vpack.c.b16 %v1166, %v1165
            %v1177 = vpack.c.b16 %v1168, %v1167
            %v1178 = vpack.c.b16 %v1170, %v1169
            %1187 = vmatprep.subr.bf16.mxu0 0
            %1188 = vmatpush1.bf16.msra.mxu0 %v1171
            %1189 = vmatprep.subr.bf16.mxu0 0
            %1190 = vmatpush1.bf16.msra.mxu0 %v1172
            %1191 = vmatprep.subr.bf16.mxu0 0
            %1192 = vmatpush1.bf16.msra.mxu0 %v1173
            %1193 = vmatprep.subr.bf16.mxu0 0
            %1194 = vmatpush1.bf16.msra.mxu0 %v1174
            %1195 = vmatprep.subr.bf16.mxu0 0
            %1196 = vmatpush1.bf16.msra.mxu0 %v1175
            %1197 = vmatprep.subr.bf16.mxu0 0
            %1198 = vmatpush1.bf16.msra.mxu0 %v1176
            %1199 = vmatprep.subr.bf16.mxu0 0
            %1200 = vmatpush1.bf16.msra.mxu0 %v1177
            %1201 = vmatprep.subr.bf16.mxu0 0
            %1202 = vmatpush1.bf16.msra.mxu0 %v1178
            %1203 = vmatprep.subr.bf16.mxu0 0
            %1204 = vmatpush1.bf16.msra.mxu0 0
            %1205 = vmatprep.subr.bf16.mxu0 0
            %1206 = vmatpush1.bf16.msra.mxu0 0
            %1207 = vmatprep.subr.bf16.mxu0 0
            %1208 = vmatpush1.bf16.msra.mxu0 0
            %1209 = vmatprep.subr.bf16.mxu0 0
            %1210 = vmatpush1.bf16.msra.mxu0 0
            %1211 = vmatprep.subr.bf16.mxu0 0
            %1212 = vmatpush1.bf16.msra.mxu0 0
            %1213 = vmatprep.subr.bf16.mxu0 0
            %1214 = vmatpush1.bf16.msra.mxu0 0
            %1215 = vmatprep.subr.bf16.mxu0 0
            %1216 = vmatpush1.bf16.msra.mxu0 0
            %1217 = vmatprep.subr.bf16.mxu0 0
            %1218 = vmatpush1.bf16.msra.mxu0 0
            %1219 = vmatprep.mubr.bf16.mxu0 0
            %1220 = vmatmul.mubr.bf16.gmra.mrb[0].mxu0 %v1115
            %v1221 = vpop.f32.mrb[0].mxu0
            %v1222 = vadd.f32 0.0, %v1221
            %v1223 = vpop.f32.mrb[0].mxu0
            %v1224 = vpop.f32.mrb[0].mxu0
            %v1225 = vadd.f32 0.0, %v1224
            %v1226 = vpop.f32.mrb[0].mxu0
            %1227 = vmatprep.mubr.bf16.mxu0 0
            %1228 = vmatmul.mubr.bf16.gmra.mrb[0].mxu0 %v1116
            %v1229 = vpop.f32.mrb[0].mxu0
            %v1230 = vadd.f32 0.0, %v1229
            %v1231 = vpop.f32.mrb[0].mxu0
            %v1232 = vpop.f32.mrb[0].mxu0
            %v1233 = vadd.f32 0.0, %v1232
            %v1234 = vpop.f32.mrb[0].mxu0
            %1235 = vmatprep.mubr.bf16.mxu0 0
            %1236 = vmatmul.mubr.bf16.gmra.mrb[0].mxu0 %v1117
            %v1237 = vpop.f32.mrb[0].mxu0
            %v1238 = vadd.f32 0.0, %v1237
            %v1239 = vpop.f32.mrb[0].mxu0
            %v1240 = vpop.f32.mrb[0].mxu0
            %v1241 = vadd.f32 0.0, %v1240
            %v1242 = vpop.f32.mrb[0].mxu0
            %1243 = vmatprep.mubr.bf16.mxu0 0
            %1244 = vmatmul.mubr.bf16.gmra.mrb[0].mxu0 %v1118
            %v1245 = vpop.f32.mrb[0].mxu0
            %v1246 = vadd.f32 0.0, %v1245
            %v1247 = vpop.f32.mrb[0].mxu0
            %v1248 = vpop.f32.mrb[0].mxu0
            %v1249 = vadd.f32 0.0, %v1248
            %v1250 = vpop.f32.mrb[0].mxu0
            %1251 = vmatprep.mubr.bf16.mxu0 0
            %1252 = vmatmul.mubr.bf16.gmra.mrb[0].mxu0 %v1119
            %v1253 = vpop.f32.mrb[0].mxu0
            %v1254 = vadd.f32 0.0, %v1253
            %v1255 = vpop.f32.mrb[0].mxu0
            %v1256 = vpop.f32.mrb[0].mxu0
            %v1257 = vadd.f32 0.0, %v1256
            %v1258 = vpop.f32.mrb[0].mxu0
            %1259 = vmatprep.mubr.bf16.mxu0 0
            %1260 = vmatmul.mubr.bf16.gmra.mrb[0].mxu0 %v1120
            %v1261 = vpop.f32.mrb[0].mxu0
            %v1262 = vadd.f32 0.0, %v1261
            %v1263 = vpop.f32.mrb[0].mxu0
            %v1264 = vpop.f32.mrb[0].mxu0
            %v1265 = vadd.f32 0.0, %v1264
            %v1266 = vpop.f32.mrb[0].mxu0
            %1267 = vmatprep.mubr.bf16.mxu0 0
            %1268 = vmatmul.mubr.bf16.gmra.mrb[0].mxu0 %v1121
            %v1269 = vpop.f32.mrb[0].mxu0
            %v1270 = vadd.f32 0.0, %v1269
            %v1271 = vpop.f32.mrb[0].mxu0
            %v1272 = vpop.f32.mrb[0].mxu0
            %v1273 = vadd.f32 0.0, %v1272
            %v1274 = vpop.f32.mrb[0].mxu0
            %1275 = vmatprep.mubr.bf16.mxu0 0
            %1276 = vmatmul.mubr.bf16.gmra.mrb[0].mxu0 %v1122
            %v1277 = vpop.f32.mrb[0].mxu0
            %v1278 = vadd.f32 0.0, %v1277
            %v1279 = vpop.f32.mrb[0].mxu0
            %v1280 = vpop.f32.mrb[0].mxu0
            %v1281 = vadd.f32 0.0, %v1280
            %v1282 = vpop.f32.mrb[0].mxu0
            %1283 = vdwg.mxu0
            %v1284 = vpack.c.bf16 %v1225, %v1222
            %v1285 = vpack.c.bf16 %v1233, %v1230
            %v1286 = vpack.c.bf16 %v1241, %v1238
            %v1287 = vpack.c.bf16 %v1249, %v1246
            %v1288 = vpack.c.bf16 %v1257, %v1254
            %v1289 = vpack.c.bf16 %v1265, %v1262
            %v1290 = vpack.c.bf16 %v1273, %v1270
            %v1291 = vpack.c.bf16 %v1281, %v1278
            %1292 = vst [vmem:[#allocation2] sm:$0xff] %v1284
            %1293 = vst [vmem:[#allocation2 + $0x8] sm:$0xff] %v1285
            %1294 = vst [vmem:[#allocation2 + $0x10] sm:$0xff] %v1286
            %1295 = vst [vmem:[#allocation2 + $0x18] sm:$0xff] %v1287
            %1296 = vst [vmem:[#allocation2 + $0x20] sm:$0xff] %v1288
            %1297 = vst [vmem:[#allocation2 + $0x28] sm:$0xff] %v1289
            %1298 = vst [vmem:[#allocation2 + $0x30] sm:$0xff] %v1290
            %1299 = vst [vmem:[#allocation2 + $0x38] sm:$0xff] %v1291
          $region64: #{tpu_custom_call.1} parent=55 // pred_fallthru
            _
        $region56: #{tpu_custom_call.1} parent=51 // pred_fallthru
          _
        %p1300 = scmp.eq.s32.totalorder %s29, 1
        // Predicated region
        $region65: #{tpu_custom_call.1} parent=51 // pred_check
          %p1301 = pneg %p1300
        $region66: #{tpu_custom_call.1} parent=51 // pred_check_branch
          %1303 = sbr.rel (%p1301) target = $region68
        $region67: #{tpu_custom_call.1} parent=51 // pred_region
          %v1304 = vld [vmem:[%s391] sm:$0xf]
          %v1305 = vld [vmem:[%s391 + $0x4] sm:$0xf]
          %v1306 = vld [vmem:[%s391 + $0x8] sm:$0xf]
          %v1307 = vld [vmem:[%s391 + $0xc] sm:$0xf]
          %v1308 = vld [vmem:[%s391 + $0x10] sm:$0xf]
          %v1309 = vld [vmem:[%s391 + $0x14] sm:$0xf]
          %v1310 = vld [vmem:[%s391 + $0x18] sm:$0xf]
          %v1311 = vld [vmem:[%s391 + $0x1c] sm:$0xf]
          %v1312 = vld [vmem:[%s391 + $0x20] sm:$0xf]
          %v1313 = vld [vmem:[%s391 + $0x24] sm:$0xf]
          %v1314 = vld [vmem:[%s391 + $0x28] sm:$0xf]
          %v1315 = vld [vmem:[%s391 + $0x2c] sm:$0xf]
          %v1316 = vld [vmem:[%s391 + $0x30] sm:$0xf]
          %v1317 = vld [vmem:[%s391 + $0x34] sm:$0xf]
          %v1318 = vld [vmem:[%s391 + $0x38] sm:$0xf]
          %v1319 = vld [vmem:[%s391 + $0x3c] sm:$0xf]
          %v1320 = vld [vmem:[#allocation2] sm:$0xff]
          %v1321 = vld [vmem:[#allocation2 + $0x8] sm:$0xff]
          %v1322 = vld [vmem:[#allocation2 + $0x10] sm:$0xff]
          %v1323 = vld [vmem:[#allocation2 + $0x18] sm:$0xff]
          %v1324 = vld [vmem:[#allocation2 + $0x20] sm:$0xff]
          %v1325 = vld [vmem:[#allocation2 + $0x28] sm:$0xff]
          %v1326 = vld [vmem:[#allocation2 + $0x30] sm:$0xff]
          %v1327 = vld [vmem:[#allocation2 + $0x38] sm:$0xff]
          %v1344 = vunpack.c.l.b16 %v1304
          %v1345 = vunpack.c.l.b16 %v1305
          %v1346 = vunpack.c.l.b16 %v1306
          %v1347 = vunpack.c.l.b16 %v1307
          %v1348 = vunpack.c.l.b16 %v1308
          %v1349 = vunpack.c.l.b16 %v1309
          %v1350 = vunpack.c.l.b16 %v1310
          %v1351 = vunpack.c.l.b16 %v1311
          %v1352 = vunpack.c.l.b16 %v1312
          %v1353 = vunpack.c.l.b16 %v1313
          %v1354 = vunpack.c.l.b16 %v1314
          %v1355 = vunpack.c.l.b16 %v1315
          %v1356 = vunpack.c.l.b16 %v1316
          %v1357 = vunpack.c.l.b16 %v1317
          %v1358 = vunpack.c.l.b16 %v1318
          %v1359 = vunpack.c.l.b16 %v1319
          %v1360 = vpack.c.b16 %v1345, %v1344
          %v1361 = vpack.c.b16 %v1347, %v1346
          %v1362 = vpack.c.b16 %v1349, %v1348
          %v1363 = vpack.c.b16 %v1351, %v1350
          %v1364 = vpack.c.b16 %v1353, %v1352
          %v1365 = vpack.c.b16 %v1355, %v1354
          %v1366 = vpack.c.b16 %v1357, %v1356
          %v1367 = vpack.c.b16 %v1359, %v1358
          %1376 = vmatprep.subr.bf16.mxu0 0
          %1377 = vmatpush1.bf16.msra.mxu0 %v1320
          %1378 = vmatprep.subr.bf16.mxu0 0
          %1379 = vmatpush1.bf16.msra.mxu0 %v1321
          %1380 = vmatprep.subr.bf16.mxu0 0
          %1381 = vmatpush1.bf16.msra.mxu0 %v1322
          %1382 = vmatprep.subr.bf16.mxu0 0
          %1383 = vmatpush1.bf16.msra.mxu0 %v1323
          %1384 = vmatprep.subr.bf16.mxu0 0
          %1385 = vmatpush1.bf16.msra.mxu0 %v1324
          %1386 = vmatprep.subr.bf16.mxu0 0
          %1387 = vmatpush1.bf16.msra.mxu0 %v1325
          %1388 = vmatprep.subr.bf16.mxu0 0
          %1389 = vmatpush1.bf16.msra.mxu0 %v1326
          %1390 = vmatprep.subr.bf16.mxu0 0
          %1391 = vmatpush1.bf16.msra.mxu0 %v1327
          %1392 = vmatprep.subr.bf16.mxu0 0
          %1393 = vmatpush1.bf16.msra.mxu0 0
          %1394 = vmatprep.subr.bf16.mxu0 0
          %1395 = vmatpush1.bf16.msra.mxu0 0
          %1396 = vmatprep.subr.bf16.mxu0 0
          %1397 = vmatpush1.bf16.msra.mxu0 0
          %1398 = vmatprep.subr.bf16.mxu0 0
          %1399 = vmatpush1.bf16.msra.mxu0 0
          %1400 = vmatprep.subr.bf16.mxu0 0
          %1401 = vmatpush1.bf16.msra.mxu0 0
          %1402 = vmatprep.subr.bf16.mxu0 0
          %1403 = vmatpush1.bf16.msra.mxu0 0
          %1404 = vmatprep.subr.bf16.mxu0 0
          %1405 = vmatpush1.bf16.msra.mxu0 0
          %1406 = vmatprep.subr.bf16.mxu0 0
          %1407 = vmatpush1.bf16.msra.mxu0 0
          %1408 = vmatprep.mubr.bf16.mxu0 0
          %1409 = vmatmul.mubr.bf16.gmra.mrb[0].mxu0 %v1360
          %v1410 = vpop.f32.mrb[0].mxu0
          %v1411 = vadd.f32 0.0, %v1410
          %v1412 = vpop.f32.mrb[0].mxu0
          %v1413 = vpop.f32.mrb[0].mxu0
          %v1414 = vadd.f32 0.0, %v1413
          %v1415 = vpop.f32.mrb[0].mxu0
          %1416 = vmatprep.mubr.bf16.mxu0 0
          %1417 = vmatmul.mubr.bf16.gmra.mrb[0].mxu0 %v1361
          %v1418 = vpop.f32.mrb[0].mxu0
          %v1419 = vadd.f32 0.0, %v1418
          %v1420 = vpop.f32.mrb[0].mxu0
          %v1421 = vpop.f32.mrb[0].mxu0
          %v1422 = vadd.f32 0.0, %v1421
          %v1423 = vpop.f32.mrb[0].mxu0
          %1424 = vmatprep.mubr.bf16.mxu0 0
          %1425 = vmatmul.mubr.bf16.gmra.mrb[0].mxu0 %v1362
          %v1426 = vpop.f32.mrb[0].mxu0
          %v1427 = vadd.f32 0.0, %v1426
          %v1428 = vpop.f32.mrb[0].mxu0
          %v1429 = vpop.f32.mrb[0].mxu0
          %v1430 = vadd.f32 0.0, %v1429
          %v1431 = vpop.f32.mrb[0].mxu0
          %1432 = vmatprep.mubr.bf16.mxu0 0
          %1433 = vmatmul.mubr.bf16.gmra.mrb[0].mxu0 %v1363
          %v1434 = vpop.f32.mrb[0].mxu0
          %v1435 = vadd.f32 0.0, %v1434
          %v1436 = vpop.f32.mrb[0].mxu0
          %v1437 = vpop.f32.mrb[0].mxu0
          %v1438 = vadd.f32 0.0, %v1437
          %v1439 = vpop.f32.mrb[0].mxu0
          %1440 = vmatprep.mubr.bf16.mxu0 0
          %1441 = vmatmul.mubr.bf16.gmra.mrb[0].mxu0 %v1364
          %v1442 = vpop.f32.mrb[0].mxu0
          %v1443 = vadd.f32 0.0, %v1442
          %v1444 = vpop.f32.mrb[0].mxu0
          %v1445 = vpop.f32.mrb[0].mxu0
          %v1446 = vadd.f32 0.0, %v1445
          %v1447 = vpop.f32.mrb[0].mxu0
          %1448 = vmatprep.mubr.bf16.mxu0 0
          %1449 = vmatmul.mubr.bf16.gmra.mrb[0].mxu0 %v1365
          %v1450 = vpop.f32.mrb[0].mxu0
          %v1451 = vadd.f32 0.0, %v1450
          %v1452 = vpop.f32.mrb[0].mxu0
          %v1453 = vpop.f32.mrb[0].mxu0
          %v1454 = vadd.f32 0.0, %v1453
          %v1455 = vpop.f32.mrb[0].mxu0
          %1456 = vmatprep.mubr.bf16.mxu0 0
          %1457 = vmatmul.mubr.bf16.gmra.mrb[0].mxu0 %v1366
          %v1458 = vpop.f32.mrb[0].mxu0
          %v1459 = vadd.f32 0.0, %v1458
          %v1460 = vpop.f32.mrb[0].mxu0
          %v1461 = vpop.f32.mrb[0].mxu0
          %v1462 = vadd.f32 0.0, %v1461
          %v1463 = vpop.f32.mrb[0].mxu0
          %1464 = vmatprep.mubr.bf16.mxu0 0
          %1465 = vmatmul.mubr.bf16.gmra.mrb[0].mxu0 %v1367
          %v1466 = vpop.f32.mrb[0].mxu0
          %v1467 = vadd.f32 0.0, %v1466
          %v1468 = vpop.f32.mrb[0].mxu0
          %v1469 = vpop.f32.mrb[0].mxu0
          %v1470 = vadd.f32 0.0, %v1469
          %v1471 = vpop.f32.mrb[0].mxu0
          %1472 = vdwg.mxu0
          %v1473 = vld [vmem:[%s408] sm:$0xff]
          %v1474 = vld [vmem:[%s408 + $0x8] sm:$0xff]
          %v1475 = vld [vmem:[%s408 + $0x10] sm:$0xff]
          %v1476 = vld [vmem:[%s408 + $0x18] sm:$0xff]
          %v1477 = vld [vmem:[%s408 + $0x20] sm:$0xff]
          %v1478 = vld [vmem:[%s408 + $0x28] sm:$0xff]
          %v1479 = vld [vmem:[%s408 + $0x30] sm:$0xff]
          %v1480 = vld [vmem:[%s408 + $0x38] sm:$0xff]
          %v1481 = vld [vmem:[%s408 + $0x40] sm:$0xff]
          %v1482 = vld [vmem:[%s408 + $0x48] sm:$0xff]
          %v1483 = vld [vmem:[%s408 + $0x50] sm:$0xff]
          %v1484 = vld [vmem:[%s408 + $0x58] sm:$0xff]
          %v1485 = vld [vmem:[%s408 + $0x60] sm:$0xff]
          %v1486 = vld [vmem:[%s408 + $0x68] sm:$0xff]
          %v1487 = vld [vmem:[%s408 + $0x70] sm:$0xff]
          %v1488 = vld [vmem:[%s408 + $0x78] sm:$0xff]
          %1490 = vset.pattern.permute.xlu0 0
          %1491 = vperm.xlu0 %1490, %v1473
          %v1492 = vpop.permute.xlu0 %1491
          %1495 = vset.pattern.permute.xlu0 0
          %1496 = vperm.xlu0 %1495, %v1474
          %v1497 = vpop.permute.xlu0 %1496
          %1500 = vset.pattern.permute.xlu0 0
          %1501 = vperm.xlu0 %1500, %v1475
          %v1502 = vpop.permute.xlu0 %1501
          %1505 = vset.pattern.permute.xlu0 0
          %1506 = vperm.xlu0 %1505, %v1476
          %v1507 = vpop.permute.xlu0 %1506
          %1510 = vset.pattern.permute.xlu0 0
          %1511 = vperm.xlu0 %1510, %v1477
          %v1512 = vpop.permute.xlu0 %1511
          %1515 = vset.pattern.permute.xlu0 0
          %1516 = vperm.xlu0 %1515, %v1478
          %v1517 = vpop.permute.xlu0 %1516
          %1520 = vset.pattern.permute.xlu0 0
          %1521 = vperm.xlu0 %1520, %v1479
          %v1522 = vpop.permute.xlu0 %1521
          %1525 = vset.pattern.permute.xlu0 0
          %1526 = vperm.xlu0 %1525, %v1480
          %v1527 = vpop.permute.xlu0 %1526
          %1530 = vset.pattern.permute.xlu0 0
          %1531 = vperm.xlu0 %1530, %v1481
          %v1532 = vpop.permute.xlu0 %1531
          %1535 = vset.pattern.permute.xlu0 0
          %1536 = vperm.xlu0 %1535, %v1482
          %v1537 = vpop.permute.xlu0 %1536
          %1540 = vset.pattern.permute.xlu0 0
          %1541 = vperm.xlu0 %1540, %v1483
          %v1542 = vpop.permute.xlu0 %1541
          %1545 = vset.pattern.permute.xlu0 0
          %1546 = vperm.xlu0 %1545, %v1484
          %v1547 = vpop.permute.xlu0 %1546
          %1550 = vset.pattern.permute.xlu0 0
          %1551 = vperm.xlu0 %1550, %v1485
          %v1552 = vpop.permute.xlu0 %1551
          %1555 = vset.pattern.permute.xlu0 0
          %1556 = vperm.xlu0 %1555, %v1486
          %v1557 = vpop.permute.xlu0 %1556
          %1560 = vset.pattern.permute.xlu0 0
          %1561 = vperm.xlu0 %1560, %v1487
          %v1562 = vpop.permute.xlu0 %1561
          %1565 = vset.pattern.permute.xlu0 0
          %1566 = vperm.xlu0 %1565, %v1488
          %v1567 = vpop.permute.xlu0 %1566
          %v1569 = vmul.f32 %v1411, %v1492
          %v1570 = vmul.f32 %v1414, %v1497
          %v1571 = vmul.f32 %v1419, %v1502
          %v1572 = vmul.f32 %v1422, %v1507
          %v1573 = vmul.f32 %v1427, %v1512
          %v1574 = vmul.f32 %v1430, %v1517
          %v1575 = vmul.f32 %v1435, %v1522
          %v1576 = vmul.f32 %v1438, %v1527
          %v1577 = vmul.f32 %v1443, %v1532
          %v1578 = vmul.f32 %v1446, %v1537
          %v1579 = vmul.f32 %v1451, %v1542
          %v1580 = vmul.f32 %v1454, %v1547
          %v1581 = vmul.f32 %v1459, %v1552
          %v1582 = vmul.f32 %v1462, %v1557
          %v1583 = vmul.f32 %v1467, %v1562
          %v1584 = vmul.f32 %v1470, %v1567
          %v1585 = vld [vmem:[%s5] sm:$0x1]
          %v1587 = vlaneseq
          %v1588 = vshrl.u32 %v1587, 7
          %v1589 = vsub.s32 0, %v1588
          %v1590 = vrot.slane %v1585, %v1589
          %v1592 = vadd.f32 %v1569, %v1590
          %v1593 = vadd.f32 %v1570, %v1590
          %v1594 = vadd.f32 %v1571, %v1590
          %v1595 = vadd.f32 %v1572, %v1590
          %v1596 = vadd.f32 %v1573, %v1590
          %v1597 = vadd.f32 %v1574, %v1590
          %v1598 = vadd.f32 %v1575, %v1590
          %v1599 = vadd.f32 %v1576, %v1590
          %v1600 = vadd.f32 %v1577, %v1590
          %v1601 = vadd.f32 %v1578, %v1590
          %v1602 = vadd.f32 %v1579, %v1590
          %v1603 = vadd.f32 %v1580, %v1590
          %v1604 = vadd.f32 %v1581, %v1590
          %v1605 = vadd.f32 %v1582, %v1590
          %v1606 = vadd.f32 %v1583, %v1590
          %v1607 = vadd.f32 %v1584, %v1590
          %vm1608 = vcmp.ge.f32.partialorder %v1592, 0.0
          %vm1609 = vcmp.ge.f32.partialorder %v1593, 0.0
          %vm1610 = vcmp.ge.f32.partialorder %v1594, 0.0
          %vm1611 = vcmp.ge.f32.partialorder %v1595, 0.0
          %vm1612 = vcmp.ge.f32.partialorder %v1596, 0.0
          %vm1613 = vcmp.ge.f32.partialorder %v1597, 0.0
          %vm1614 = vcmp.ge.f32.partialorder %v1598, 0.0
          %vm1615 = vcmp.ge.f32.partialorder %v1599, 0.0
          %vm1616 = vcmp.ge.f32.partialorder %v1600, 0.0
          %vm1617 = vcmp.ge.f32.partialorder %v1601, 0.0
          %vm1618 = vcmp.ge.f32.partialorder %v1602, 0.0
          %vm1619 = vcmp.ge.f32.partialorder %v1603, 0.0
          %vm1620 = vcmp.ge.f32.partialorder %v1604, 0.0
          %vm1621 = vcmp.ge.f32.partialorder %v1605, 0.0
          %vm1622 = vcmp.ge.f32.partialorder %v1606, 0.0
          %vm1623 = vcmp.ge.f32.partialorder %v1607, 0.0
          %v1624 = vmul.f32 %v1592, 0.25
          %v1625 = vmul.f32 %v1593, 0.25
          %v1626 = vmul.f32 %v1594, 0.25
          %v1627 = vmul.f32 %v1595, 0.25
          %v1628 = vmul.f32 %v1596, 0.25
          %v1629 = vmul.f32 %v1597, 0.25
          %v1630 = vmul.f32 %v1598, 0.25
          %v1631 = vmul.f32 %v1599, 0.25
          %v1632 = vmul.f32 %v1600, 0.25
          %v1633 = vmul.f32 %v1601, 0.25
          %v1634 = vmul.f32 %v1602, 0.25
          %v1635 = vmul.f32 %v1603, 0.25
          %v1636 = vmul.f32 %v1604, 0.25
          %v1637 = vmul.f32 %v1605, 0.25
          %v1638 = vmul.f32 %v1606, 0.25
          %v1639 = vmul.f32 %v1607, 0.25
          %v1640 = vsel %vm1608, %v1592, %v1624
          %v1641 = vsel %vm1609, %v1593, %v1625
          %v1642 = vsel %vm1610, %v1594, %v1626
          %v1643 = vsel %vm1611, %v1595, %v1627
          %v1644 = vsel %vm1612, %v1596, %v1628
          %v1645 = vsel %vm1613, %v1597, %v1629
          %v1646 = vsel %vm1614, %v1598, %v1630
          %v1647 = vsel %vm1615, %v1599, %v1631
          %v1648 = vsel %vm1616, %v1600, %v1632
          %v1649 = vsel %vm1617, %v1601, %v1633
          %v1650 = vsel %vm1618, %v1602, %v1634
          %v1651 = vsel %vm1619, %v1603, %v1635
          %v1652 = vsel %vm1620, %v1604, %v1636
          %v1653 = vsel %vm1621, %v1605, %v1637
          %v1654 = vsel %vm1622, %v1606, %v1638
          %v1655 = vsel %vm1623, %v1607, %v1639
          %1656 = vst [vmem:[%s386] sm:$0xff] %v1640
          %1657 = vst [vmem:[%s386 + $0x8] sm:$0xff] %v1641
          %1658 = vst [vmem:[%s386 + $0x10] sm:$0xff] %v1642
          %1659 = vst [vmem:[%s386 + $0x18] sm:$0xff] %v1643
          %1660 = vst [vmem:[%s386 + $0x20] sm:$0xff] %v1644
          %1661 = vst [vmem:[%s386 + $0x28] sm:$0xff] %v1645
          %1662 = vst [vmem:[%s386 + $0x30] sm:$0xff] %v1646
          %1663 = vst [vmem:[%s386 + $0x38] sm:$0xff] %v1647
          %1664 = vst [vmem:[%s386 + $0x40] sm:$0xff] %v1648
          %1665 = vst [vmem:[%s386 + $0x48] sm:$0xff] %v1649
          %1666 = vst [vmem:[%s386 + $0x50] sm:$0xff] %v1650
          %1667 = vst [vmem:[%s386 + $0x58] sm:$0xff] %v1651
          %1668 = vst [vmem:[%s386 + $0x60] sm:$0xff] %v1652
          %1669 = vst [vmem:[%s386 + $0x68] sm:$0xff] %v1653
          %1670 = vst [vmem:[%s386 + $0x70] sm:$0xff] %v1654
          %1671 = vst [vmem:[%s386 + $0x78] sm:$0xff] %v1655
        $region68: #{tpu_custom_call.1} parent=51 // pred_fallthru
          _
        %s1672 = sand.u32 %s257, 1
        %s1673 = scalar_lea.sflag [#allocation6], %s1672
        %s1674 = sand.u32 %s257, 1
        %s1675 = smul.addr %s1674, 128
        %s1676 = scalar_lea.vmem [#allocation5], %s1675
        // Predicated region
        $region69: #{tpu_custom_call.1} parent=51 // pred_check
          %p1677 = pneg %p239
        $region70: #{tpu_custom_call.1} parent=51 // pred_check_branch
          %1679 = sbr.rel (%p1677) target = $region72
        $region71: #{tpu_custom_call.1} parent=51 // pred_region
          %s1681 = ssub.s32 2048, 2048
          %1682 = vsyncadd [#allocation4], %s1681
          %s1683 = sshll.u32 [#allocation3], 4
          %s1684 = int_to_ptr.vmem [resolvable:$true] %s1683
          %1689 = dma.vmem_to_hbm [thread:$0]  %s1684, 2048, %s8, [#allocation4], 128, 128, 8
        $region72: #{tpu_custom_call.1} parent=51 // pred_fallthru
          _
        // Predicated region
        $region73: #{tpu_custom_call.1} parent=51 // pred_check
          %p1690 = pneg %p267
        $region74: #{tpu_custom_call.1} parent=51 // pred_check_branch
          %1692 = sbr.rel (%p1690) target = $region76
        $region75: #{tpu_custom_call.1} parent=51 // pred_region
          %s1693 = smul.u32 %s30, %s29
          %s1694 = smul.u32 16, %s1693
          %s1696 = ssub.s32 2048, 2048
          %1697 = vsyncadd %s1673, %s1696
          %s1698 = smul.addr %s1694, 128
          %s1699 = scalar_lea.hbm %s9, %s1698
          %s1700 = sshll.u32 %s1676, 4
          %s1701 = int_to_ptr.vmem [resolvable:$true] %s1700
          %1706 = dma.vmem_to_hbm [thread:$0]  %s1701, 2048, %s1699, %s1673, 128, 128, 8
        $region76: #{tpu_custom_call.1} parent=51 // pred_fallthru
          _
        // Predicated region
        $region77: #{tpu_custom_call.1} parent=51 // pred_check
          %p1707 = pneg %p239
        $region78: #{tpu_custom_call.1} parent=51 // pred_check_branch
          %1709 = sbr.rel (%p1707) target = $region80
        $region79: #{tpu_custom_call.1} parent=51 // pred_region
          %1710 = dma.done [#allocation4], 2048
        $region80: #{tpu_custom_call.1} parent=51 // pred_fallthru
          _
      $region52: #{tpu_custom_call.1} parent=5 // pred_fallthru
        _
      %p1711 = scmp.le.s32.totalorder 2, %s20
      // Predicated region
      $region81: #{tpu_custom_call.1} parent=5 // pred_check
        %p1712 = pneg %p1711
      $region82: #{tpu_custom_call.1} parent=5 // pred_check_branch
        %1714 = sbr.rel (%p1712) target = $region84
      $region83: #{tpu_custom_call.1} parent=5 // pred_region
        %s1715 = ssub.s32 %s20, 2
        // Predicated region
        $region85: #{tpu_custom_call.1} parent=83 // pred_check
          %p1716 = pneg %p273
        $region86: #{tpu_custom_call.1} parent=83 // pred_check_branch
          %1718 = sbr.rel (%p1716) target = $region88
        $region87: #{tpu_custom_call.1} parent=83 // pred_region
          %s1719 = sand.u32 %s258, 1
          %s1720 = scalar_lea.sflag [#allocation6], %s1719
          %s1721 = sand.u32 %s258, 1
          %s1722 = smul.addr %s1721, 128
          %s1723 = scalar_lea.vmem [#allocation5], %s1722
          %1724 = dma.done %s1720, 2048
        $region88: #{tpu_custom_call.1} parent=83 // pred_fallthru
          _
      $region84: #{tpu_custom_call.1} parent=5 // pred_fallthru
        _
    $region6: #{tpu_custom_call.1} parent=1 // loop_footer
      %s24 = sadd.s32 1, %s20
    $region7: #{tpu_custom_call.1} parent=1 // loop_footer_branch
      %19 = sbr.rel target = $region3
    $region8: #{tpu_custom_call.1} parent=1 // loop_exit
      _
    %1725 = vsyncpa [#allocation4], 1
    %s1726 = scalar_lea.sflag [#allocation4], 1
    %1727 = vsyncpa %s1726, 1
    %1728 = vsyncpa [#allocation6], 1
    %s1729 = scalar_lea.sflag [#allocation6], 1
    %1730 = vsyncpa %s1729, 1

</llo_original>
